<compile_context>
chip_gen: v6e
topology: v6e:2x2x1
jax: 0.10.0
libtpu: 0.0.40
codegen_flags: <defaults>
</compile_context>

<pallas_src>
import math

import jax
import jax.numpy as jnp
import numpy as np
from jax.experimental import pallas as pl
from jax.experimental.pallas import tpu as pltpu

# small, self-consistent synthetic config
B = 2      # batch
S = 8      # seq length
D = 32     # hidden size
F = 64     # MLP hidden size
L = 2      # transformer layers
V = 64     # vocab size
NEG_INF = -1e9

# packed small-parameter slab layout (one (1, F) row each, D-wide rows zero-padded):
#   per layer: bq, bk, bv, bo, ln1g, ln1b, b1, b2, ln2g, ln2b
#   tail:      reward-head weight (D), reward-head bias (1)
ROWS_PER_LAYER = 10
N_SMALL_ROWS = L * ROWS_PER_LAYER + 2


def _layernorm(x, g, b, eps=1e-5):
    mu = jnp.mean(x, axis=-1, keepdims=True)
    var = jnp.mean(jnp.square(x - mu), axis=-1, keepdims=True)
    return (x - mu) * jax.lax.rsqrt(var + eps) * g + b


def reward_kernel(x_ref, mask_ref, wqkv_ref, wo_ref, w1_ref, w2_ref,
                  small_ref, out_ref):
    """Single grid step: full batch through the encoder stack -> rewards (1, B)."""
    h = x_ref[...].reshape(B * S, D)            # fold batch into MXU rows
    key_bias = (1.0 - mask_ref[...]) * NEG_INF  # (B, 1, S) additive key mask

    def vec(r, n):
        # one packed small-parameter row, lanes [0:n)  (aligned, offset 0)
        return small_ref[r:r + 1, 0:n]

    scale = 1.0 / math.sqrt(D)
    for l in range(L):                          # static unroll over layers
        base = l * ROWS_PER_LAYER

        # --- single-head self-attention (post-LN residual block) ---
        # TODO(synk): real HF backbones are multi-head; single head keeps the
        # in-kernel layout trivially (8,128)-friendly at these tiny sizes.
        hb = h.astype(jnp.bfloat16)             # bf16 MXU operands, f32 accumulation
        q = jnp.dot(hb, wqkv_ref[l, 0], preferred_element_type=jnp.float32) + vec(base + 0, D)
        k = jnp.dot(hb, wqkv_ref[l, 1], preferred_element_type=jnp.float32) + vec(base + 1, D)
        v = jnp.dot(hb, wqkv_ref[l, 2], preferred_element_type=jnp.float32) + vec(base + 2, D)
        q3 = q.reshape(B, S, D)
        k3 = k.reshape(B, S, D)
        v3 = v.reshape(B, S, D)

        scores = jnp.einsum('bqd,bkd->bqk', q3, k3,
                            preferred_element_type=jnp.float32) * scale
        scores = scores + key_bias              # mask padded keys
        m = jnp.max(scores, axis=-1, keepdims=True)
        e = jnp.exp(scores - m)
        denom = jnp.sum(e, axis=-1, keepdims=True)
        p = e * pl.reciprocal(denom, approx=True)   # divide on the EUP slot

        ctx = jnp.einsum('bqk,bkd->bqd', p, v3,
                         preferred_element_type=jnp.float32).reshape(B * S, D)
        attn = jnp.dot(ctx.astype(jnp.bfloat16), wo_ref[l],
                       preferred_element_type=jnp.float32) + vec(base + 3, D)
        h = _layernorm(h + attn, vec(base + 4, D), vec(base + 5, D))

        # --- MLP block ---
        # TODO(synk): HF/PyTorch GELU defaults to exact erf; tanh approx used here.
        ff = jnp.dot(h.astype(jnp.bfloat16), w1_ref[l],
                     preferred_element_type=jnp.float32) + vec(base + 6, F)
        ff = jax.nn.gelu(ff, approximate=True)
        ff = jnp.dot(ff.astype(jnp.bfloat16), w2_ref[l],
                     preferred_element_type=jnp.float32) + vec(base + 7, D)
        h = _layernorm(h + ff, vec(base + 8, D), vec(base + 9, D))

    # --- pooled_output = last_hidden_state[:, -1, :]; reward head on VPU/XLU ---
    pooled = h.reshape(B, S, D)[:, S - 1, :]        # (B, D)
    wr = vec(L * ROWS_PER_LAYER + 0, D)             # (1, D)
    br = vec(L * ROWS_PER_LAYER + 1, 1)             # (1, 1)
    reward = jnp.sum(pooled * wr, axis=-1).reshape(1, B) + br   # mul + lane reduce
    out_ref[...] = reward                           # lane-dense (1, B) store


def init_params(key):
    ks = jax.random.split(key, 16)

    def nrm(k, shape, std=0.02, dtype=jnp.float32):
        return (std * jax.random.normal(k, shape)).astype(dtype)

    return dict(
        tok_emb=nrm(ks[0], (V, D)),
        pos_emb=nrm(ks[1], (S, D)),
        # big matmul weights in bf16 (MXU operands); accumulation stays f32.
        wqkv=nrm(ks[2], (L, 3, D, D), dtype=jnp.bfloat16),
        wo=nrm(ks[3], (L, D, D), dtype=jnp.bfloat16),
        w1=nrm(ks[4], (L, D, F), dtype=jnp.bfloat16),
        w2=nrm(ks[5], (L, F, D), dtype=jnp.bfloat16),
        # small per-layer vectors stay f32 (elementwise path; v5e has no bf16 VPU).
        bqkv=nrm(ks[6], (L, 3, D)),
        bo=nrm(ks[7], (L, D)),
        ln1g=1.0 + nrm(ks[8], (L, D)),
        ln1b=nrm(ks[9], (L, D)),
        b1=nrm(ks[10], (L, F)),
        b2=nrm(ks[11], (L, D)),
        ln2g=1.0 + nrm(ks[12], (L, D)),
        ln2b=nrm(ks[13], (L, D)),
        # reward head: nn.init.normal_(weight, 0, 0.02); nn.init.zeros_(bias)
        wr=nrm(ks[14], (D,), std=0.02),
        br=jnp.zeros((1,), jnp.float32),
    )


def pack_small(p):
    """Pack all tiny bias/LN/head vectors into one (N_SMALL_ROWS, F) f32 slab."""
    def pad(v):
        v = np.asarray(v, np.float32).reshape(-1)
        row = np.zeros((F,), np.float32)
        row[:v.shape[0]] = v
        return row

    rows = []
    for l in range(L):
        rows += [pad(p['bqkv'][l, j]) for j in range(3)]
        rows += [pad(p['bo'][l]), pad(p['ln1g'][l]), pad(p['ln1b'][l]),
                 pad(p['b1'][l]), pad(p['b2'][l]),
                 pad(p['ln2g'][l]), pad(p['ln2b'][l])]
    rows += [pad(p['wr']), pad(p['br'])]
    assert len(rows) == N_SMALL_ROWS
    return jnp.asarray(np.stack(rows, axis=0))


def reward_model_forward(input_ids, attention_mask, p, small):
    """Equivalent of RewardModel.forward: [B, S] ids/mask -> [B, 1] rewards."""
    # glue: embedding lookup (gather) stays in plain JAX outside the kernel.
    x = (p['tok_emb'][input_ids] + p['pos_emb'][None]).astype(jnp.float32)   # (B, S, D)
    mask3 = attention_mask.astype(jnp.float32).reshape(B, 1, S)              # (B, 1, S)

    inputs = [x, mask3, p['wqkv'], p['wo'], p['w1'], p['w2'], small]

    # advisory cost estimate so XLA can schedule neighbours around this tiny call
    flops = B * S * L * (3 * 2 * D * D + 2 * D * D + 2 * 2 * S * D + 2 * 2 * D * F) + B * 2 * D
    transcendentals = L * B * S * (S + F + 3)
    bytes_accessed = sum(int(np.prod(a.shape)) * a.dtype.itemsize for a in inputs) + B * 4
    cost = pl.CostEstimate(flops=flops, transcendentals=transcendentals,
                           bytes_accessed=bytes_accessed)

    def full_spec(a):
        return pl.BlockSpec(a.shape, lambda i, _n=a.ndim: (0,) * _n)

    # TODO(synk): for a real HF backbone, replace full-resident weights with a
    # layer grid axis ("arbitrary") streaming per-layer tiles and set
    # vmem_limit_bytes explicitly (v7x VMEM is 64 MiB vs 128 MiB on v5e/v6e).
    out = pl.pallas_call(
        reward_kernel,
        out_shape=jax.ShapeDtypeStruct((1, B), jnp.float32),
        grid=(1,),                                  # grid over batch collapsed
        in_specs=[full_spec(a) for a in inputs],
        out_specs=pl.BlockSpec((1, B), lambda i: (0, 0)),
        compiler_params=pltpu.CompilerParams(
            dimension_semantics=("arbitrary",)),
        cost_estimate=cost,
    )(*inputs)
    return out.reshape(B, 1)


def reference_forward(input_ids, attention_mask, p):
    """Pure-JAX reference for the same synthetic model (same bf16 dot operands)."""
    x = (p['tok_emb'][input_ids] + p['pos_emb'][None]).astype(jnp.float32)
    key_bias = (1.0 - attention_mask.astype(jnp.float32))[:, None, :] * NEG_INF
    h = x
    scale = 1.0 / math.sqrt(D)
    for l in range(L):
        hb = h.astype(jnp.bfloat16)
        q = jnp.einsum('bsd,de->bse', hb, p['wqkv'][l, 0],
                       preferred_element_type=jnp.float32) + p['bqkv'][l, 0]
        k = jnp.einsum('bsd,de->bse', hb, p['wqkv'][l, 1],
                       preferred_element_type=jnp.float32) + p['bqkv'][l, 1]
        v = jnp.einsum('bsd,de->bse', hb, p['wqkv'][l, 2],
                       preferred_element_type=jnp.float32) + p['bqkv'][l, 2]
        scores = jnp.einsum('bqd,bkd->bqk', q, k) * scale + key_bias
        pr = jax.nn.softmax(scores, axis=-1)
        ctx = jnp.einsum('bqk,bkd->bqd', pr, v)
        attn = jnp.einsum('bsd,de->bse', ctx.astype(jnp.bfloat16), p['wo'][l],
                          preferred_element_type=jnp.float32) + p['bo'][l]
        h = _layernorm(h + attn, p['ln1g'][l], p['ln1b'][l])
        ff = jnp.einsum('bsd,df->bsf', h.astype(jnp.bfloat16), p['w1'][l],
                        preferred_element_type=jnp.float32) + p['b1'][l]
        ff = jax.nn.gelu(ff, approximate=True)
        ff = jnp.einsum('bsf,fd->bsd', ff.astype(jnp.bfloat16), p['w2'][l],
                        preferred_element_type=jnp.float32) + p['b2'][l]
        h = _layernorm(h + ff, p['ln2g'][l], p['ln2b'][l])
    pooled = h[:, -1, :]
    return pooled @ p['wr'].reshape(D, 1) + p['br']


if __name__ == "__main__":
    key = jax.random.PRNGKey(0)
    pkey, ikey = jax.random.split(key)
    params = init_params(pkey)
    small = pack_small(params)

    input_ids = jax.random.randint(ikey, (B, S), 0, V, dtype=jnp.int32)
    attention_mask = jnp.ones((B, S), jnp.int32).at[1, 6:].set(0)  # pad tail of sample 1

    rewards = reward_model_forward(input_ids, attention_mask, params, small)
    rewards = jax.block_until_ready(rewards)
    assert rewards.shape == (B, 1), rewards.shape

    ref = reference_forward(input_ids, attention_mask, params)
    np.testing.assert_allclose(np.asarray(rewards), np.asarray(ref),
                               rtol=2e-3, atol=2e-3)
    print("KERNEL_OK")
</pallas_src>

<mosaic_0001>
module attributes {stable_mosaic.version = 11 : i64} {
  func.func @reward_kernel(%arg0: i32, %arg1: memref<2x8x32xf32, #tpu.memory_space<vmem>>, %arg2: memref<2x1x8xf32, #tpu.memory_space<vmem>>, %arg3: memref<2x3x32x32xbf16, #tpu.memory_space<vmem>>, %arg4: memref<2x32x32xbf16, #tpu.memory_space<vmem>>, %arg5: memref<2x32x64xbf16, #tpu.memory_space<vmem>>, %arg6: memref<2x64x32xbf16, #tpu.memory_space<vmem>>, %arg7: memref<22x64xf32, #tpu.memory_space<vmem>>, %arg8: memref<1x2xf32, #tpu.memory_space<vmem>>) attributes {dimension_semantics = [#tpu.dimension_semantics<arbitrary>], iteration_bounds = array<i64: 1>, scalar_prefetch = 0 : i64, scratch_operands = 0 : i64, tpu.core_type = #tpu.core_type<tc>, window_params = [{pipeline_mode = #tpu.pipeline_mode<synchronous>, transform_indices = @transform_0, window_bounds = array<i64: 2, 8, 32>}, {pipeline_mode = #tpu.pipeline_mode<synchronous>, transform_indices = @transform_1, window_bounds = array<i64: 2, 1, 8>}, {pipeline_mode = #tpu.pipeline_mode<synchronous>, transform_indices = @transform_2, window_bounds = array<i64: 2, 3, 32, 32>}, {pipeline_mode = #tpu.pipeline_mode<synchronous>, transform_indices = @transform_3, window_bounds = array<i64: 2, 32, 32>}, {pipeline_mode = #tpu.pipeline_mode<synchronous>, transform_indices = @transform_4, window_bounds = array<i64: 2, 32, 64>}, {pipeline_mode = #tpu.pipeline_mode<synchronous>, transform_indices = @transform_5, window_bounds = array<i64: 2, 64, 32>}, {pipeline_mode = #tpu.pipeline_mode<synchronous>, transform_indices = @transform_6, window_bounds = array<i64: 22, 64>}, {pipeline_mode = #tpu.pipeline_mode<synchronous>, transform_indices = @transform_7, window_bounds = array<i64: 1, 2>}]} {
    %c0 = arith.constant 0 : index
    %c0_0 = arith.constant 0 : index
    %c0_1 = arith.constant 0 : index
    %0 = vector.load %arg1[%c0, %c0_0, %c0_1] : memref<2x8x32xf32, #tpu.memory_space<vmem>>, vector<2x8x32xf32>
    %1 = vector.shape_cast %0 : vector<2x8x32xf32> to vector<16x32xf32>
    %c0_2 = arith.constant 0 : index
    %c0_3 = arith.constant 0 : index
    %c0_4 = arith.constant 0 : index
    %2 = vector.load %arg2[%c0_2, %c0_3, %c0_4] : memref<2x1x8xf32, #tpu.memory_space<vmem>>, vector<2x1x8xf32>
    %cst = arith.constant 1.000000e+00 : f32
    %3 = vector.broadcast %cst : f32 to vector<2x1x8xf32>
    %4 = arith.subf %3, %2 : vector<2x1x8xf32>
    %cst_5 = arith.constant -1.000000e+09 : f32
    %5 = vector.broadcast %cst_5 : f32 to vector<2x1x8xf32>
    %6 = arith.mulf %4, %5 : vector<2x1x8xf32>
    %7 = arith.truncf %1 : vector<16x32xf32> to vector<16x32xbf16>
    %c0_6 = arith.constant 0 : index
    %c0_7 = arith.constant 0 : index
    %c0_8 = arith.constant 0 : index
    %c0_9 = arith.constant 0 : index
    %8 = vector.load %arg3[%c0_6, %c0_7, %c0_8, %c0_9] : memref<2x3x32x32xbf16, #tpu.memory_space<vmem>>, vector<1x1x32x32xbf16>
    %9 = vector.shape_cast %8 : vector<1x1x32x32xbf16> to vector<32x32xbf16>
    %cst_10 = arith.constant dense<0.000000e+00> : vector<16x32xf32>
    %10 = tpu.matmul %7, %9, %cst_10 {dimension_numbers = #tpu.dot_dimension_numbers<[1], [0], [0], [1], [0, 0, 1, 1], [], []>} : vector<16x32xbf16>, vector<32x32xbf16>, vector<16x32xf32> -> vector<16x32xf32>
    %c0_11 = arith.constant 0 : index
    %c0_12 = arith.constant 0 : index
    %11 = vector.load %arg7[%c0_11, %c0_12] : memref<22x64xf32, #tpu.memory_space<vmem>>, vector<1x32xf32>
    %12 = vector.broadcast %11 : vector<1x32xf32> to vector<16x32xf32>
    %13 = arith.addf %10, %12 : vector<16x32xf32>
    %c0_13 = arith.constant 0 : index
    %c1 = arith.constant 1 : index
    %c0_14 = arith.constant 0 : index
    %c0_15 = arith.constant 0 : index
    %14 = vector.load %arg3[%c0_13, %c1, %c0_14, %c0_15] : memref<2x3x32x32xbf16, #tpu.memory_space<vmem>>, vector<1x1x32x32xbf16>
    %15 = vector.shape_cast %14 : vector<1x1x32x32xbf16> to vector<32x32xbf16>
    %cst_16 = arith.constant dense<0.000000e+00> : vector<16x32xf32>
    %16 = tpu.matmul %7, %15, %cst_16 {dimension_numbers = #tpu.dot_dimension_numbers<[1], [0], [0], [1], [0, 0, 1, 1], [], []>} : vector<16x32xbf16>, vector<32x32xbf16>, vector<16x32xf32> -> vector<16x32xf32>
    %c1_17 = arith.constant 1 : index
    %c0_18 = arith.constant 0 : index
    %17 = vector.load %arg7[%c1_17, %c0_18] : memref<22x64xf32, #tpu.memory_space<vmem>>, vector<1x32xf32>
    %18 = vector.broadcast %17 : vector<1x32xf32> to vector<16x32xf32>
    %19 = arith.addf %16, %18 : vector<16x32xf32>
    %c0_19 = arith.constant 0 : index
    %c2 = arith.constant 2 : index
    %c0_20 = arith.constant 0 : index
    %c0_21 = arith.constant 0 : index
    %20 = vector.load %arg3[%c0_19, %c2, %c0_20, %c0_21] : memref<2x3x32x32xbf16, #tpu.memory_space<vmem>>, vector<1x1x32x32xbf16>
    %21 = vector.shape_cast %20 : vector<1x1x32x32xbf16> to vector<32x32xbf16>
    %cst_22 = arith.constant dense<0.000000e+00> : vector<16x32xf32>
    %22 = tpu.matmul %7, %21, %cst_22 {dimension_numbers = #tpu.dot_dimension_numbers<[1], [0], [0], [1], [0, 0, 1, 1], [], []>} : vector<16x32xbf16>, vector<32x32xbf16>, vector<16x32xf32> -> vector<16x32xf32>
    %c2_23 = arith.constant 2 : index
    %c0_24 = arith.constant 0 : index
    %23 = vector.load %arg7[%c2_23, %c0_24] : memref<22x64xf32, #tpu.memory_space<vmem>>, vector<1x32xf32>
    %24 = vector.broadcast %23 : vector<1x32xf32> to vector<16x32xf32>
    %25 = arith.addf %22, %24 : vector<16x32xf32>
    %26 = vector.shape_cast %13 : vector<16x32xf32> to vector<2x8x32xf32>
    %27 = vector.shape_cast %19 : vector<16x32xf32> to vector<2x8x32xf32>
    %28 = vector.shape_cast %25 : vector<16x32xf32> to vector<2x8x32xf32>
    "tpu.trace_start"() <{level = 10 : i32, message = "bqd,bkd->bqk"}> : () -> ()
    %cst_25 = arith.constant dense<0.000000e+00> : vector<2x8x8xf32>
    %29 = tpu.matmul %26, %27, %cst_25 {dimension_numbers = #tpu.dot_dimension_numbers<[2], [2], [1], [1], [0, 0, 0, 1, 1, 1], [0], [0]>} : vector<2x8x32xf32>, vector<2x8x32xf32>, vector<2x8x8xf32> -> vector<2x8x8xf32>
    "tpu.trace_stop"() : () -> ()
    %cst_26 = arith.constant 0.176776692 : f32
    %30 = vector.broadcast %cst_26 : f32 to vector<2x8x8xf32>
    %31 = arith.mulf %29, %30 : vector<2x8x8xf32>
    %32 = vector.broadcast %6 : vector<2x1x8xf32> to vector<2x8x8xf32>
    %33 = arith.addf %31, %32 : vector<2x8x8xf32>
    %cst_27 = arith.constant dense<0xFF800000> : vector<2x8xf32>
    %34 = vector.multi_reduction <maximumf>, %33, %cst_27 [2] : vector<2x8x8xf32> to vector<2x8xf32>
    %35 = vector.shape_cast %34 : vector<2x8xf32> to vector<2x8x1xf32>
    %36 = vector.broadcast %35 : vector<2x8x1xf32> to vector<2x8x8xf32>
    %37 = arith.subf %33, %36 : vector<2x8x8xf32>
    %38 = math.exp %37 : vector<2x8x8xf32>
    %cst_28 = arith.constant dense<0.000000e+00> : vector<2x8xf32>
    %39 = vector.multi_reduction <add>, %38, %cst_28 [2] : vector<2x8x8xf32> to vector<2x8xf32>
    %40 = vector.shape_cast %39 : vector<2x8xf32> to vector<2x8x1xf32>
    %41 = tpu.reciprocal %40 {approx = true} : vector<2x8x1xf32> -> vector<2x8x1xf32>
    %42 = vector.broadcast %41 : vector<2x8x1xf32> to vector<2x8x8xf32>
    %43 = arith.mulf %38, %42 : vector<2x8x8xf32>
    "tpu.trace_start"() <{level = 10 : i32, message = "bqk,bkd->bqd"}> : () -> ()
    %cst_29 = arith.constant dense<0.000000e+00> : vector<2x8x32xf32>
    %44 = tpu.matmul %43, %28, %cst_29 {dimension_numbers = #tpu.dot_dimension_numbers<[2], [1], [1], [2], [0, 0, 0, 1, 1, 2], [0], [0]>} : vector<2x8x8xf32>, vector<2x8x32xf32>, vector<2x8x32xf32> -> vector<2x8x32xf32>
    "tpu.trace_stop"() : () -> ()
    %45 = vector.shape_cast %44 : vector<2x8x32xf32> to vector<16x32xf32>
    %46 = arith.truncf %45 : vector<16x32xf32> to vector<16x32xbf16>
    %c0_30 = arith.constant 0 : index
    %c0_31 = arith.constant 0 : index
    %c0_32 = arith.constant 0 : index
    %47 = vector.load %arg4[%c0_30, %c0_31, %c0_32] : memref<2x32x32xbf16, #tpu.memory_space<vmem>>, vector<1x32x32xbf16>
    %48 = vector.shape_cast %47 : vector<1x32x32xbf16> to vector<32x32xbf16>
    %cst_33 = arith.constant dense<0.000000e+00> : vector<16x32xf32>
    %49 = tpu.matmul %46, %48, %cst_33 {dimension_numbers = #tpu.dot_dimension_numbers<[1], [0], [0], [1], [0, 0, 1, 1], [], []>} : vector<16x32xbf16>, vector<32x32xbf16>, vector<16x32xf32> -> vector<16x32xf32>
    %c3 = arith.constant 3 : index
    %c0_34 = arith.constant 0 : index
    %50 = vector.load %arg7[%c3, %c0_34] : memref<22x64xf32, #tpu.memory_space<vmem>>, vector<1x32xf32>
    %51 = vector.broadcast %50 : vector<1x32xf32> to vector<16x32xf32>
    %52 = arith.addf %49, %51 : vector<16x32xf32>
    %53 = arith.addf %1, %52 : vector<16x32xf32>
    %c4 = arith.constant 4 : index
    %c0_35 = arith.constant 0 : index
    %54 = vector.load %arg7[%c4, %c0_35] : memref<22x64xf32, #tpu.memory_space<vmem>>, vector<1x32xf32>
    %c5 = arith.constant 5 : index
    %c0_36 = arith.constant 0 : index
    %55 = vector.load %arg7[%c5, %c0_36] : memref<22x64xf32, #tpu.memory_space<vmem>>, vector<1x32xf32>
    %cst_37 = arith.constant dense<0.000000e+00> : vector<16xf32>
    %56 = vector.multi_reduction <add>, %53, %cst_37 [1] : vector<16x32xf32> to vector<16xf32>
    %57 = vector.shape_cast %56 : vector<16xf32> to vector<16x1xf32>
    %cst_38 = arith.constant 3.200000e+01 : f32
    %58 = vector.broadcast %cst_38 : f32 to vector<16x1xf32>
    %59 = arith.divf %57, %58 : vector<16x1xf32>
    %60 = vector.broadcast %59 : vector<16x1xf32> to vector<16x32xf32>
    %61 = arith.subf %53, %60 : vector<16x32xf32>
    %62 = arith.mulf %61, %61 : vector<16x32xf32>
    %cst_39 = arith.constant dense<0.000000e+00> : vector<16xf32>
    %63 = vector.multi_reduction <add>, %62, %cst_39 [1] : vector<16x32xf32> to vector<16xf32>
    %64 = vector.shape_cast %63 : vector<16xf32> to vector<16x1xf32>
    %cst_40 = arith.constant 3.200000e+01 : f32
    %65 = vector.broadcast %cst_40 : f32 to vector<16x1xf32>
    %66 = arith.divf %64, %65 : vector<16x1xf32>
    %67 = vector.broadcast %59 : vector<16x1xf32> to vector<16x32xf32>
    %68 = arith.subf %53, %67 : vector<16x32xf32>
    %cst_41 = arith.constant 9.99999974E-6 : f32
    %69 = vector.broadcast %cst_41 : f32 to vector<16x1xf32>
    %70 = arith.addf %66, %69 : vector<16x1xf32>
    %71 = math.rsqrt %70 : vector<16x1xf32>
    %72 = vector.broadcast %71 : vector<16x1xf32> to vector<16x32xf32>
    %73 = arith.mulf %68, %72 : vector<16x32xf32>
    %74 = vector.broadcast %54 : vector<1x32xf32> to vector<16x32xf32>
    %75 = arith.mulf %73, %74 : vector<16x32xf32>
    %76 = vector.broadcast %55 : vector<1x32xf32> to vector<16x32xf32>
    %77 = arith.addf %75, %76 : vector<16x32xf32>
    %78 = arith.truncf %77 : vector<16x32xf32> to vector<16x32xbf16>
    %c0_42 = arith.constant 0 : index
    %c0_43 = arith.constant 0 : index
    %c0_44 = arith.constant 0 : index
    %79 = vector.load %arg5[%c0_42, %c0_43, %c0_44] : memref<2x32x64xbf16, #tpu.memory_space<vmem>>, vector<1x32x64xbf16>
    %80 = vector.shape_cast %79 : vector<1x32x64xbf16> to vector<32x64xbf16>
    %cst_45 = arith.constant dense<0.000000e+00> : vector<16x64xf32>
    %81 = tpu.matmul %78, %80, %cst_45 {dimension_numbers = #tpu.dot_dimension_numbers<[1], [0], [0], [1], [0, 0, 1, 1], [], []>} : vector<16x32xbf16>, vector<32x64xbf16>, vector<16x64xf32> -> vector<16x64xf32>
    %c6 = arith.constant 6 : index
    %c0_46 = arith.constant 0 : index
    %82 = vector.load %arg7[%c6, %c0_46] : memref<22x64xf32, #tpu.memory_space<vmem>>, vector<1x64xf32>
    %83 = vector.broadcast %82 : vector<1x64xf32> to vector<16x64xf32>
    %84 = arith.addf %81, %83 : vector<16x64xf32>
    %85 = arith.mulf %84, %84 : vector<16x64xf32>
    %86 = arith.mulf %84, %85 : vector<16x64xf32>
    %cst_47 = arith.constant 4.471500e-02 : f32
    %87 = vector.broadcast %cst_47 : f32 to vector<16x64xf32>
    %88 = arith.mulf %87, %86 : vector<16x64xf32>
    %89 = arith.addf %84, %88 : vector<16x64xf32>
    %cst_48 = arith.constant 0.797884583 : f32
    %90 = vector.broadcast %cst_48 : f32 to vector<16x64xf32>
    %91 = arith.mulf %90, %89 : vector<16x64xf32>
    %92 = math.tanh %91 : vector<16x64xf32>
    %cst_49 = arith.constant 1.000000e+00 : f32
    %93 = vector.broadcast %cst_49 : f32 to vector<16x64xf32>
    %94 = arith.addf %93, %92 : vector<16x64xf32>
    %cst_50 = arith.constant 5.000000e-01 : f32
    %95 = vector.broadcast %cst_50 : f32 to vector<16x64xf32>
    %96 = arith.mulf %95, %94 : vector<16x64xf32>
    %97 = arith.mulf %84, %96 : vector<16x64xf32>
    %98 = arith.truncf %97 : vector<16x64xf32> to vector<16x64xbf16>
    %c0_51 = arith.constant 0 : index
    %c0_52 = arith.constant 0 : index
    %c0_53 = arith.constant 0 : index
    %99 = vector.load %arg6[%c0_51, %c0_52, %c0_53] : memref<2x64x32xbf16, #tpu.memory_space<vmem>>, vector<1x64x32xbf16>
    %100 = vector.shape_cast %99 : vector<1x64x32xbf16> to vector<64x32xbf16>
    %cst_54 = arith.constant dense<0.000000e+00> : vector<16x32xf32>
    %101 = tpu.matmul %98, %100, %cst_54 {dimension_numbers = #tpu.dot_dimension_numbers<[1], [0], [0], [1], [0, 0, 1, 1], [], []>} : vector<16x64xbf16>, vector<64x32xbf16>, vector<16x32xf32> -> vector<16x32xf32>
    %c7 = arith.constant 7 : index
    %c0_55 = arith.constant 0 : index
    %102 = vector.load %arg7[%c7, %c0_55] : memref<22x64xf32, #tpu.memory_space<vmem>>, vector<1x32xf32>
    %103 = vector.broadcast %102 : vector<1x32xf32> to vector<16x32xf32>
    %104 = arith.addf %101, %103 : vector<16x32xf32>
    %105 = arith.addf %77, %104 : vector<16x32xf32>
    %c8 = arith.constant 8 : index
    %c0_56 = arith.constant 0 : index
    %106 = vector.load %arg7[%c8, %c0_56] : memref<22x64xf32, #tpu.memory_space<vmem>>, vector<1x32xf32>
    %c9 = arith.constant 9 : index
    %c0_57 = arith.constant 0 : index
    %107 = vector.load %arg7[%c9, %c0_57] : memref<22x64xf32, #tpu.memory_space<vmem>>, vector<1x32xf32>
    %cst_58 = arith.constant dense<0.000000e+00> : vector<16xf32>
    %108 = vector.multi_reduction <add>, %105, %cst_58 [1] : vector<16x32xf32> to vector<16xf32>
    %109 = vector.shape_cast %108 : vector<16xf32> to vector<16x1xf32>
    %cst_59 = arith.constant 3.200000e+01 : f32
    %110 = vector.broadcast %cst_59 : f32 to vector<16x1xf32>
    %111 = arith.divf %109, %110 : vector<16x1xf32>
    %112 = vector.broadcast %111 : vector<16x1xf32> to vector<16x32xf32>
    %113 = arith.subf %105, %112 : vector<16x32xf32>
    %114 = arith.mulf %113, %113 : vector<16x32xf32>
    %cst_60 = arith.constant dense<0.000000e+00> : vector<16xf32>
    %115 = vector.multi_reduction <add>, %114, %cst_60 [1] : vector<16x32xf32> to vector<16xf32>
    %116 = vector.shape_cast %115 : vector<16xf32> to vector<16x1xf32>
    %cst_61 = arith.constant 3.200000e+01 : f32
    %117 = vector.broadcast %cst_61 : f32 to vector<16x1xf32>
    %118 = arith.divf %116, %117 : vector<16x1xf32>
    %119 = vector.broadcast %111 : vector<16x1xf32> to vector<16x32xf32>
    %120 = arith.subf %105, %119 : vector<16x32xf32>
    %cst_62 = arith.constant 9.99999974E-6 : f32
    %121 = vector.broadcast %cst_62 : f32 to vector<16x1xf32>
    %122 = arith.addf %118, %121 : vector<16x1xf32>
    %123 = math.rsqrt %122 : vector<16x1xf32>
    %124 = vector.broadcast %123 : vector<16x1xf32> to vector<16x32xf32>
    %125 = arith.mulf %120, %124 : vector<16x32xf32>
    %126 = vector.broadcast %106 : vector<1x32xf32> to vector<16x32xf32>
    %127 = arith.mulf %125, %126 : vector<16x32xf32>
    %128 = vector.broadcast %107 : vector<1x32xf32> to vector<16x32xf32>
    %129 = arith.addf %127, %128 : vector<16x32xf32>
    %130 = arith.truncf %129 : vector<16x32xf32> to vector<16x32xbf16>
    %c1_63 = arith.constant 1 : index
    %c0_64 = arith.constant 0 : index
    %c0_65 = arith.constant 0 : index
    %c0_66 = arith.constant 0 : index
    %131 = vector.load %arg3[%c1_63, %c0_64, %c0_65, %c0_66] : memref<2x3x32x32xbf16, #tpu.memory_space<vmem>>, vector<1x1x32x32xbf16>
    %132 = vector.shape_cast %131 : vector<1x1x32x32xbf16> to vector<32x32xbf16>
    %cst_67 = arith.constant dense<0.000000e+00> : vector<16x32xf32>
    %133 = tpu.matmul %130, %132, %cst_67 {dimension_numbers = #tpu.dot_dimension_numbers<[1], [0], [0], [1], [0, 0, 1, 1], [], []>} : vector<16x32xbf16>, vector<32x32xbf16>, vector<16x32xf32> -> vector<16x32xf32>
    %c10 = arith.constant 10 : index
    %c0_68 = arith.constant 0 : index
    %134 = vector.load %arg7[%c10, %c0_68] : memref<22x64xf32, #tpu.memory_space<vmem>>, vector<1x32xf32>
    %135 = vector.broadcast %134 : vector<1x32xf32> to vector<16x32xf32>
    %136 = arith.addf %133, %135 : vector<16x32xf32>
    %c1_69 = arith.constant 1 : index
    %c1_70 = arith.constant 1 : index
    %c0_71 = arith.constant 0 : index
    %c0_72 = arith.constant 0 : index
    %137 = vector.load %arg3[%c1_69, %c1_70, %c0_71, %c0_72] : memref<2x3x32x32xbf16, #tpu.memory_space<vmem>>, vector<1x1x32x32xbf16>
    %138 = vector.shape_cast %137 : vector<1x1x32x32xbf16> to vector<32x32xbf16>
    %cst_73 = arith.constant dense<0.000000e+00> : vector<16x32xf32>
    %139 = tpu.matmul %130, %138, %cst_73 {dimension_numbers = #tpu.dot_dimension_numbers<[1], [0], [0], [1], [0, 0, 1, 1], [], []>} : vector<16x32xbf16>, vector<32x32xbf16>, vector<16x32xf32> -> vector<16x32xf32>
    %c11 = arith.constant 11 : index
    %c0_74 = arith.constant 0 : index
    %140 = vector.load %arg7[%c11, %c0_74] : memref<22x64xf32, #tpu.memory_space<vmem>>, vector<1x32xf32>
    %141 = vector.broadcast %140 : vector<1x32xf32> to vector<16x32xf32>
    %142 = arith.addf %139, %141 : vector<16x32xf32>
    %c1_75 = arith.constant 1 : index
    %c2_76 = arith.constant 2 : index
    %c0_77 = arith.constant 0 : index
    %c0_78 = arith.constant 0 : index
    %143 = vector.load %arg3[%c1_75, %c2_76, %c0_77, %c0_78] : memref<2x3x32x32xbf16, #tpu.memory_space<vmem>>, vector<1x1x32x32xbf16>
    %144 = vector.shape_cast %143 : vector<1x1x32x32xbf16> to vector<32x32xbf16>
    %cst_79 = arith.constant dense<0.000000e+00> : vector<16x32xf32>
    %145 = tpu.matmul %130, %144, %cst_79 {dimension_numbers = #tpu.dot_dimension_numbers<[1], [0], [0], [1], [0, 0, 1, 1], [], []>} : vector<16x32xbf16>, vector<32x32xbf16>, vector<16x32xf32> -> vector<16x32xf32>
    %c12 = arith.constant 12 : index
    %c0_80 = arith.constant 0 : index
    %146 = vector.load %arg7[%c12, %c0_80] : memref<22x64xf32, #tpu.memory_space<vmem>>, vector<1x32xf32>
    %147 = vector.broadcast %146 : vector<1x32xf32> to vector<16x32xf32>
    %148 = arith.addf %145, %147 : vector<16x32xf32>
    %149 = vector.shape_cast %136 : vector<16x32xf32> to vector<2x8x32xf32>
    %150 = vector.shape_cast %142 : vector<16x32xf32> to vector<2x8x32xf32>
    %151 = vector.shape_cast %148 : vector<16x32xf32> to vector<2x8x32xf32>
    "tpu.trace_start"() <{level = 10 : i32, message = "bqd,bkd->bqk"}> : () -> ()
    %cst_81 = arith.constant dense<0.000000e+00> : vector<2x8x8xf32>
    %152 = tpu.matmul %149, %150, %cst_81 {dimension_numbers = #tpu.dot_dimension_numbers<[2], [2], [1], [1], [0, 0, 0, 1, 1, 1], [0], [0]>} : vector<2x8x32xf32>, vector<2x8x32xf32>, vector<2x8x8xf32> -> vector<2x8x8xf32>
    "tpu.trace_stop"() : () -> ()
    %cst_82 = arith.constant 0.176776692 : f32
    %153 = vector.broadcast %cst_82 : f32 to vector<2x8x8xf32>
    %154 = arith.mulf %152, %153 : vector<2x8x8xf32>
    %155 = vector.broadcast %6 : vector<2x1x8xf32> to vector<2x8x8xf32>
    %156 = arith.addf %154, %155 : vector<2x8x8xf32>
    %cst_83 = arith.constant dense<0xFF800000> : vector<2x8xf32>
    %157 = vector.multi_reduction <maximumf>, %156, %cst_83 [2] : vector<2x8x8xf32> to vector<2x8xf32>
    %158 = vector.shape_cast %157 : vector<2x8xf32> to vector<2x8x1xf32>
    %159 = vector.broadcast %158 : vector<2x8x1xf32> to vector<2x8x8xf32>
    %160 = arith.subf %156, %159 : vector<2x8x8xf32>
    %161 = math.exp %160 : vector<2x8x8xf32>
    %cst_84 = arith.constant dense<0.000000e+00> : vector<2x8xf32>
    %162 = vector.multi_reduction <add>, %161, %cst_84 [2] : vector<2x8x8xf32> to vector<2x8xf32>
    %163 = vector.shape_cast %162 : vector<2x8xf32> to vector<2x8x1xf32>
    %164 = tpu.reciprocal %163 {approx = true} : vector<2x8x1xf32> -> vector<2x8x1xf32>
    %165 = vector.broadcast %164 : vector<2x8x1xf32> to vector<2x8x8xf32>
    %166 = arith.mulf %161, %165 : vector<2x8x8xf32>
    "tpu.trace_start"() <{level = 10 : i32, message = "bqk,bkd->bqd"}> : () -> ()
    %cst_85 = arith.constant dense<0.000000e+00> : vector<2x8x32xf32>
    %167 = tpu.matmul %166, %151, %cst_85 {dimension_numbers = #tpu.dot_dimension_numbers<[2], [1], [1], [2], [0, 0, 0, 1, 1, 2], [0], [0]>} : vector<2x8x8xf32>, vector<2x8x32xf32>, vector<2x8x32xf32> -> vector<2x8x32xf32>
    "tpu.trace_stop"() : () -> ()
    %168 = vector.shape_cast %167 : vector<2x8x32xf32> to vector<16x32xf32>
    %169 = arith.truncf %168 : vector<16x32xf32> to vector<16x32xbf16>
    %c1_86 = arith.constant 1 : index
    %c0_87 = arith.constant 0 : index
    %c0_88 = arith.constant 0 : index
    %170 = vector.load %arg4[%c1_86, %c0_87, %c0_88] : memref<2x32x32xbf16, #tpu.memory_space<vmem>>, vector<1x32x32xbf16>
    %171 = vector.shape_cast %170 : vector<1x32x32xbf16> to vector<32x32xbf16>
    %cst_89 = arith.constant dense<0.000000e+00> : vector<16x32xf32>
    %172 = tpu.matmul %169, %171, %cst_89 {dimension_numbers = #tpu.dot_dimension_numbers<[1], [0], [0], [1], [0, 0, 1, 1], [], []>} : vector<16x32xbf16>, vector<32x32xbf16>, vector<16x32xf32> -> vector<16x32xf32>
    %c13 = arith.constant 13 : index
    %c0_90 = arith.constant 0 : index
    %173 = vector.load %arg7[%c13, %c0_90] : memref<22x64xf32, #tpu.memory_space<vmem>>, vector<1x32xf32>
    %174 = vector.broadcast %173 : vector<1x32xf32> to vector<16x32xf32>
    %175 = arith.addf %172, %174 : vector<16x32xf32>
    %176 = arith.addf %129, %175 : vector<16x32xf32>
    %c14 = arith.constant 14 : index
    %c0_91 = arith.constant 0 : index
    %177 = vector.load %arg7[%c14, %c0_91] : memref<22x64xf32, #tpu.memory_space<vmem>>, vector<1x32xf32>
    %c15 = arith.constant 15 : index
    %c0_92 = arith.constant 0 : index
    %178 = vector.load %arg7[%c15, %c0_92] : memref<22x64xf32, #tpu.memory_space<vmem>>, vector<1x32xf32>
    %cst_93 = arith.constant dense<0.000000e+00> : vector<16xf32>
    %179 = vector.multi_reduction <add>, %176, %cst_93 [1] : vector<16x32xf32> to vector<16xf32>
    %180 = vector.shape_cast %179 : vector<16xf32> to vector<16x1xf32>
    %cst_94 = arith.constant 3.200000e+01 : f32
    %181 = vector.broadcast %cst_94 : f32 to vector<16x1xf32>
    %182 = arith.divf %180, %181 : vector<16x1xf32>
    %183 = vector.broadcast %182 : vector<16x1xf32> to vector<16x32xf32>
    %184 = arith.subf %176, %183 : vector<16x32xf32>
    %185 = arith.mulf %184, %184 : vector<16x32xf32>
    %cst_95 = arith.constant dense<0.000000e+00> : vector<16xf32>
    %186 = vector.multi_reduction <add>, %185, %cst_95 [1] : vector<16x32xf32> to vector<16xf32>
    %187 = vector.shape_cast %186 : vector<16xf32> to vector<16x1xf32>
    %cst_96 = arith.constant 3.200000e+01 : f32
    %188 = vector.broadcast %cst_96 : f32 to vector<16x1xf32>
    %189 = arith.divf %187, %188 : vector<16x1xf32>
    %190 = vector.broadcast %182 : vector<16x1xf32> to vector<16x32xf32>
    %191 = arith.subf %176, %190 : vector<16x32xf32>
    %cst_97 = arith.constant 9.99999974E-6 : f32
    %192 = vector.broadcast %cst_97 : f32 to vector<16x1xf32>
    %193 = arith.addf %189, %192 : vector<16x1xf32>
    %194 = math.rsqrt %193 : vector<16x1xf32>
    %195 = vector.broadcast %194 : vector<16x1xf32> to vector<16x32xf32>
    %196 = arith.mulf %191, %195 : vector<16x32xf32>
    %197 = vector.broadcast %177 : vector<1x32xf32> to vector<16x32xf32>
    %198 = arith.mulf %196, %197 : vector<16x32xf32>
    %199 = vector.broadcast %178 : vector<1x32xf32> to vector<16x32xf32>
    %200 = arith.addf %198, %199 : vector<16x32xf32>
    %201 = arith.truncf %200 : vector<16x32xf32> to vector<16x32xbf16>
    %c1_98 = arith.constant 1 : index
    %c0_99 = arith.constant 0 : index
    %c0_100 = arith.constant 0 : index
    %202 = vector.load %arg5[%c1_98, %c0_99, %c0_100] : memref<2x32x64xbf16, #tpu.memory_space<vmem>>, vector<1x32x64xbf16>
    %203 = vector.shape_cast %202 : vector<1x32x64xbf16> to vector<32x64xbf16>
    %cst_101 = arith.constant dense<0.000000e+00> : vector<16x64xf32>
    %204 = tpu.matmul %201, %203, %cst_101 {dimension_numbers = #tpu.dot_dimension_numbers<[1], [0], [0], [1], [0, 0, 1, 1], [], []>} : vector<16x32xbf16>, vector<32x64xbf16>, vector<16x64xf32> -> vector<16x64xf32>
    %c16 = arith.constant 16 : index
    %c0_102 = arith.constant 0 : index
    %205 = vector.load %arg7[%c16, %c0_102] : memref<22x64xf32, #tpu.memory_space<vmem>>, vector<1x64xf32>
    %206 = vector.broadcast %205 : vector<1x64xf32> to vector<16x64xf32>
    %207 = arith.addf %204, %206 : vector<16x64xf32>
    %208 = arith.mulf %207, %207 : vector<16x64xf32>
    %209 = arith.mulf %207, %208 : vector<16x64xf32>
    %cst_103 = arith.constant 4.471500e-02 : f32
    %210 = vector.broadcast %cst_103 : f32 to vector<16x64xf32>
    %211 = arith.mulf %210, %209 : vector<16x64xf32>
    %212 = arith.addf %207, %211 : vector<16x64xf32>
    %cst_104 = arith.constant 0.797884583 : f32
    %213 = vector.broadcast %cst_104 : f32 to vector<16x64xf32>
    %214 = arith.mulf %213, %212 : vector<16x64xf32>
    %215 = math.tanh %214 : vector<16x64xf32>
    %cst_105 = arith.constant 1.000000e+00 : f32
    %216 = vector.broadcast %cst_105 : f32 to vector<16x64xf32>
    %217 = arith.addf %216, %215 : vector<16x64xf32>
    %cst_106 = arith.constant 5.000000e-01 : f32
    %218 = vector.broadcast %cst_106 : f32 to vector<16x64xf32>
    %219 = arith.mulf %218, %217 : vector<16x64xf32>
    %220 = arith.mulf %207, %219 : vector<16x64xf32>
    %221 = arith.truncf %220 : vector<16x64xf32> to vector<16x64xbf16>
    %c1_107 = arith.constant 1 : index
    %c0_108 = arith.constant 0 : index
    %c0_109 = arith.constant 0 : index
    %222 = vector.load %arg6[%c1_107, %c0_108, %c0_109] : memref<2x64x32xbf16, #tpu.memory_space<vmem>>, vector<1x64x32xbf16>
    %223 = vector.shape_cast %222 : vector<1x64x32xbf16> to vector<64x32xbf16>
    %cst_110 = arith.constant dense<0.000000e+00> : vector<16x32xf32>
    %224 = tpu.matmul %221, %223, %cst_110 {dimension_numbers = #tpu.dot_dimension_numbers<[1], [0], [0], [1], [0, 0, 1, 1], [], []>} : vector<16x64xbf16>, vector<64x32xbf16>, vector<16x32xf32> -> vector<16x32xf32>
    %c17 = arith.constant 17 : index
    %c0_111 = arith.constant 0 : index
    %225 = vector.load %arg7[%c17, %c0_111] : memref<22x64xf32, #tpu.memory_space<vmem>>, vector<1x32xf32>
    %226 = vector.broadcast %225 : vector<1x32xf32> to vector<16x32xf32>
    %227 = arith.addf %224, %226 : vector<16x32xf32>
    %228 = arith.addf %200, %227 : vector<16x32xf32>
    %c18 = arith.constant 18 : index
    %c0_112 = arith.constant 0 : index
    %229 = vector.load %arg7[%c18, %c0_112] : memref<22x64xf32, #tpu.memory_space<vmem>>, vector<1x32xf32>
    %c19 = arith.constant 19 : index
    %c0_113 = arith.constant 0 : index
    %230 = vector.load %arg7[%c19, %c0_113] : memref<22x64xf32, #tpu.memory_space<vmem>>, vector<1x32xf32>
    %cst_114 = arith.constant dense<0.000000e+00> : vector<16xf32>
    %231 = vector.multi_reduction <add>, %228, %cst_114 [1] : vector<16x32xf32> to vector<16xf32>
    %232 = vector.shape_cast %231 : vector<16xf32> to vector<16x1xf32>
    %cst_115 = arith.constant 3.200000e+01 : f32
    %233 = vector.broadcast %cst_115 : f32 to vector<16x1xf32>
    %234 = arith.divf %232, %233 : vector<16x1xf32>
    %235 = vector.broadcast %234 : vector<16x1xf32> to vector<16x32xf32>
    %236 = arith.subf %228, %235 : vector<16x32xf32>
    %237 = arith.mulf %236, %236 : vector<16x32xf32>
    %cst_116 = arith.constant dense<0.000000e+00> : vector<16xf32>
    %238 = vector.multi_reduction <add>, %237, %cst_116 [1] : vector<16x32xf32> to vector<16xf32>
    %239 = vector.shape_cast %238 : vector<16xf32> to vector<16x1xf32>
    %cst_117 = arith.constant 3.200000e+01 : f32
    %240 = vector.broadcast %cst_117 : f32 to vector<16x1xf32>
    %241 = arith.divf %239, %240 : vector<16x1xf32>
    %242 = vector.broadcast %234 : vector<16x1xf32> to vector<16x32xf32>
    %243 = arith.subf %228, %242 : vector<16x32xf32>
    %cst_118 = arith.constant 9.99999974E-6 : f32
    %244 = vector.broadcast %cst_118 : f32 to vector<16x1xf32>
    %245 = arith.addf %241, %244 : vector<16x1xf32>
    %246 = math.rsqrt %245 : vector<16x1xf32>
    %247 = vector.broadcast %246 : vector<16x1xf32> to vector<16x32xf32>
    %248 = arith.mulf %243, %247 : vector<16x32xf32>
    %249 = vector.broadcast %229 : vector<1x32xf32> to vector<16x32xf32>
    %250 = arith.mulf %248, %249 : vector<16x32xf32>
    %251 = vector.broadcast %230 : vector<1x32xf32> to vector<16x32xf32>
    %252 = arith.addf %250, %251 : vector<16x32xf32>
    %253 = vector.shape_cast %252 : vector<16x32xf32> to vector<2x8x32xf32>
    %254 = vector.extract_strided_slice %253 {offsets = [0, 7, 0], sizes = [2, 1, 32], strides = [1, 1, 1]} : vector<2x8x32xf32> to vector<2x1x32xf32>
    %255 = vector.shape_cast %254 : vector<2x1x32xf32> to vector<2x32xf32>
    %c20 = arith.constant 20 : index
    %c0_119 = arith.constant 0 : index
    %256 = vector.load %arg7[%c20, %c0_119] : memref<22x64xf32, #tpu.memory_space<vmem>>, vector<1x32xf32>
    %c21 = arith.constant 21 : index
    %c0_120 = arith.constant 0 : index
    %257 = vector.load %arg7[%c21, %c0_120] : memref<22x64xf32, #tpu.memory_space<vmem>>, vector<1x1xf32>
    %258 = vector.broadcast %256 : vector<1x32xf32> to vector<2x32xf32>
    %259 = arith.mulf %255, %258 : vector<2x32xf32>
    %cst_121 = arith.constant dense<0.000000e+00> : vector<2xf32>
    %260 = vector.multi_reduction <add>, %259, %cst_121 [1] : vector<2x32xf32> to vector<2xf32>
    %261 = vector.shape_cast %260 : vector<2xf32> to vector<1x2xf32>
    %262 = vector.broadcast %257 : vector<1x1xf32> to vector<1x2xf32>
    %263 = arith.addf %261, %262 : vector<1x2xf32>
    %c0_122 = arith.constant 0 : index
    %c0_123 = arith.constant 0 : index
    %264 = vector.load %arg8[%c0_122, %c0_123] : memref<1x2xf32, #tpu.memory_space<vmem>>, vector<1x2xf32>
    tpu.vector_store %arg8[%c0_122, %c0_123], %263 {strides = array<i32>} : memref<1x2xf32, #tpu.memory_space<vmem>>, vector<1x2xf32>,
    return
  }
  func.func @transform_0(%arg0: i32) -> (i32, i32, i32) {
    %c0_i32 = arith.constant 0 : i32
    %c0_i32_0 = arith.constant 0 : i32
    %c0_i32_1 = arith.constant 0 : i32
    %c0_i32_2 = arith.constant 0 : i32
    return %c0_i32, %c0_i32_0, %c0_i32_1 : i32, i32, i32
  }
  func.func @transform_1(%arg0: i32) -> (i32, i32, i32) {
    %c0_i32 = arith.constant 0 : i32
    %c0_i32_0 = arith.constant 0 : i32
    %c0_i32_1 = arith.constant 0 : i32
    %c0_i32_2 = arith.constant 0 : i32
    return %c0_i32, %c0_i32_0, %c0_i32_1 : i32, i32, i32
  }
  func.func @transform_2(%arg0: i32) -> (i32, i32, i32, i32) {
    %c0_i32 = arith.constant 0 : i32
    %c0_i32_0 = arith.constant 0 : i32
    %c0_i32_1 = arith.constant 0 : i32
    %c0_i32_2 = arith.constant 0 : i32
    %c0_i32_3 = arith.constant 0 : i32
    return %c0_i32, %c0_i32_0, %c0_i32_1, %c0_i32_2 : i32, i32, i32, i32
  }
  func.func @transform_3(%arg0: i32) -> (i32, i32, i32) {
    %c0_i32 = arith.constant 0 : i32
    %c0_i32_0 = arith.constant 0 : i32
    %c0_i32_1 = arith.constant 0 : i32
    %c0_i32_2 = arith.constant 0 : i32
    return %c0_i32, %c0_i32_0, %c0_i32_1 : i32, i32, i32
  }
  func.func @transform_4(%arg0: i32) -> (i32, i32, i32) {
    %c0_i32 = arith.constant 0 : i32
    %c0_i32_0 = arith.constant 0 : i32
    %c0_i32_1 = arith.constant 0 : i32
    %c0_i32_2 = arith.constant 0 : i32
    return %c0_i32, %c0_i32_0, %c0_i32_1 : i32, i32, i32
  }
  func.func @transform_5(%arg0: i32) -> (i32, i32, i32) {
    %c0_i32 = arith.constant 0 : i32
    %c0_i32_0 = arith.constant 0 : i32
    %c0_i32_1 = arith.constant 0 : i32
    %c0_i32_2 = arith.constant 0 : i32
    return %c0_i32, %c0_i32_0, %c0_i32_1 : i32, i32, i32
  }
  func.func @transform_6(%arg0: i32) -> (i32, i32) {
    %c0_i32 = arith.constant 0 : i32
    %c0_i32_0 = arith.constant 0 : i32
    %c0_i32_1 = arith.constant 0 : i32
    return %c0_i32, %c0_i32_0 : i32, i32
  }
  func.func @transform_7(%arg0: i32) -> (i32, i32) {
    %c0_i32 = arith.constant 0 : i32
    %c0_i32_0 = arith.constant 0 : i32
    %c0_i32_1 = arith.constant 0 : i32
    return %c0_i32, %c0_i32_0 : i32, i32
  }
}

</mosaic_0001>

<llo_original>
// kernel: tpu_custom_call.1
$region0: #{tpu_custom_call.1}
  #allocation0 [shape = 'u32[]', space=smem, size = 0x4, offset = 0x4, fixed_abs, tag = 'smem constant byte address 0x4 - core index']
  #allocation1 [shape = 'u32[144,128]{1,0:T(1,128)}', space=vmem, size = 0x12000, scoped, tag = 'internal scratch']
  %s0 = inlined_call_operand.hbm [shape: f32[2,8,32], index: 0, kind: input, shape index: {}]
  %s1 = inlined_call_operand.vmem [shape: f32[2,1,8], index: 1, kind: input, shape index: {}]
  %s2 = inlined_call_operand.vmem [shape: bf16[2,3,32,32], index: 2, kind: input, shape index: {}]
  %s3 = inlined_call_operand.hbm [shape: bf16[2,32,32], index: 3, kind: input, shape index: {}]
  %s4 = inlined_call_operand.hbm [shape: bf16[2,32,64], index: 4, kind: input, shape index: {}]
  %s5 = inlined_call_operand.vmem [shape: bf16[2,64,32], index: 5, kind: input, shape index: {}]
  %s6 = inlined_call_operand.hbm [shape: f32[22,64], index: 6, kind: input, shape index: {}]
  %s7 = inlined_call_operand.hbm [shape: f32[1,2], index: 7, kind: output, shape index: {}]
  %s8 = sld [smem:[#allocation0]]
  $region54: #{tpu_custom_call.1} parent=0
    _
  %s10 = ssub.s32 1, %s8
  %s11 = scalar_select 0, %s10, %s8
  $region1: #{tpu_custom_call.1} parent=0
    #allocation2 [shape = 'u8[8192]{0}', space=vmem, size = 0x2000, scoped, tag = 'input window, operand 0, single buffered']
    #allocation3 [shape = 's32[1]{0}', space=sflag, size = 0x4, scoped, tag = 'scoped memory for tpu_custom_call.1']
    #allocation4 [shape = 's32[1]{0}', space=sflag, size = 0x4, scoped, tag = 'scoped memory for tpu_custom_call.1']
    #allocation5 [shape = 'u8[16384]{0}', space=vmem, size = 0x4000, scoped, tag = 'input window, operand 3, single buffered']
    #allocation6 [shape = 's32[1]{0}', space=sflag, size = 0x4, scoped, tag = 'scoped memory for tpu_custom_call.1']
    #allocation7 [shape = 'u8[16384]{0}', space=vmem, size = 0x4000, scoped, tag = 'input window, operand 4, single buffered']
    #allocation8 [shape = 'u8[12288]{0}', space=vmem, size = 0x3000, scoped, tag = 'input window, operand 6, single buffered']
    #allocation9 [shape = 's32[1]{0}', space=sflag, size = 0x4, scoped, tag = 'scoped memory for tpu_custom_call.1']
    #allocation10 [shape = 'u8[512]{0}', space=vmem, size = 0x400, scoped, tag = 'output window, operand 0, single buffered']
    %12 = vsyncpa [#allocation3], 0
    %13 = vsyncpa [#allocation6], 0
    %14 = vsyncpa [#allocation9], 0
    %15 = vsyncpa [#allocation4], 0
    // Predicated region
    $region2: #{tpu_custom_call.1} parent=1 // pred_check
      _
    $region3: #{tpu_custom_call.1} parent=1 // pred_check_branch
      %17 = sbr.rel (0) target = $region5
    $region4: #{tpu_custom_call.1} parent=1 // pred_region
      %s19 = ssub.s32 256, 256
      %20 = vsyncadd [#allocation3], %s19
      %s21 = sshll.u32 [#allocation2], 4
      %s22 = int_to_ptr.vmem [resolvable:$true] %s21
      %27 = dma.hbm_to_vmem [thread:$0]  %s0, 256, %s22, [#allocation3], 128, 128, 8
    $region5: #{tpu_custom_call.1} parent=1 // pred_fallthru
      _
    // Predicated region
    $region6: #{tpu_custom_call.1} parent=1 // pred_check
      _
    $region7: #{tpu_custom_call.1} parent=1 // pred_check_branch
      %29 = sbr.rel (0) target = $region9
    $region8: #{tpu_custom_call.1} parent=1 // pred_region
      _
    $region9: #{tpu_custom_call.1} parent=1 // pred_fallthru
      _
    // Predicated region
    $region10: #{tpu_custom_call.1} parent=1 // pred_check
      _
    $region11: #{tpu_custom_call.1} parent=1 // pred_check_branch
      %31 = sbr.rel (0) target = $region13
    $region12: #{tpu_custom_call.1} parent=1 // pred_region
      _
    $region13: #{tpu_custom_call.1} parent=1 // pred_fallthru
      _
    // Predicated region
    $region14: #{tpu_custom_call.1} parent=1 // pred_check
      _
    $region15: #{tpu_custom_call.1} parent=1 // pred_check_branch
      %33 = sbr.rel (0) target = $region17
    $region16: #{tpu_custom_call.1} parent=1 // pred_region
      %s35 = ssub.s32 512, 512
      %36 = vsyncadd [#allocation6], %s35
      %s37 = sshll.u32 [#allocation5], 4
      %s38 = int_to_ptr.vmem [resolvable:$true] %s37
      %43 = dma.hbm_to_vmem [thread:$0]  %s3, 512, %s38, [#allocation6], 64, 64, 4
    $region17: #{tpu_custom_call.1} parent=1 // pred_fallthru
      _
    // Predicated region
    $region18: #{tpu_custom_call.1} parent=1 // pred_check
      _
    $region19: #{tpu_custom_call.1} parent=1 // pred_check_branch
      %45 = sbr.rel (0) target = $region21
    $region20: #{tpu_custom_call.1} parent=1 // pred_region
      %s47 = ssub.s32 512, 512
      %48 = vsyncadd [#allocation6], %s47
      %s49 = sshll.u32 [#allocation7], 4
      %s50 = int_to_ptr.vmem [resolvable:$true] %s49
      %55 = dma.hbm_to_vmem [thread:$0]  %s4, 512, %s50, [#allocation6], 64, 64, 4
    $region21: #{tpu_custom_call.1} parent=1 // pred_fallthru
      _
    // Predicated region
    $region22: #{tpu_custom_call.1} parent=1 // pred_check
      _
    $region23: #{tpu_custom_call.1} parent=1 // pred_check_branch
      %57 = sbr.rel (0) target = $region25
    $region24: #{tpu_custom_call.1} parent=1 // pred_region
      _
    $region25: #{tpu_custom_call.1} parent=1 // pred_fallthru
      _
    // Predicated region
    $region26: #{tpu_custom_call.1} parent=1 // pred_check
      _
    $region27: #{tpu_custom_call.1} parent=1 // pred_check_branch
      %59 = sbr.rel (0) target = $region29
    $region28: #{tpu_custom_call.1} parent=1 // pred_region
      %s61 = ssub.s32 384, 384
      %62 = vsyncadd [#allocation9], %s61
      %s63 = sshll.u32 [#allocation8], 4
      %s64 = int_to_ptr.vmem [resolvable:$true] %s63
      %69 = dma.hbm_to_vmem [thread:$0]  %s6, 384, %s64, [#allocation9], 128, 128, 8
    $region29: #{tpu_custom_call.1} parent=1 // pred_fallthru
      _
    // Predicated region
    $region30: #{tpu_custom_call.1} parent=1 // pred_check
      _
    $region31: #{tpu_custom_call.1} parent=1 // pred_check_branch
      %71 = sbr.rel (0) target = $region33
    $region32: #{tpu_custom_call.1} parent=1 // pred_region
      %72 = dma.done [#allocation3], 256
    $region33: #{tpu_custom_call.1} parent=1 // pred_fallthru
      _
    // Predicated region
    $region34: #{tpu_custom_call.1} parent=1 // pred_check
      _
    $region35: #{tpu_custom_call.1} parent=1 // pred_check_branch
      %74 = sbr.rel (0) target = $region37
    $region36: #{tpu_custom_call.1} parent=1 // pred_region
      %75 = dma.done [#allocation6], 512
    $region37: #{tpu_custom_call.1} parent=1 // pred_fallthru
      _
    // Predicated region
    $region38: #{tpu_custom_call.1} parent=1 // pred_check
      _
    $region39: #{tpu_custom_call.1} parent=1 // pred_check_branch
      %77 = sbr.rel (0) target = $region41
    $region40: #{tpu_custom_call.1} parent=1 // pred_region
      %78 = dma.done [#allocation6], 512
    $region41: #{tpu_custom_call.1} parent=1 // pred_fallthru
      _
    // Predicated region
    $region42: #{tpu_custom_call.1} parent=1 // pred_check
      _
    $region43: #{tpu_custom_call.1} parent=1 // pred_check_branch
      %80 = sbr.rel (0) target = $region45
    $region44: #{tpu_custom_call.1} parent=1 // pred_region
      %81 = dma.done [#allocation9], 384
    $region45: #{tpu_custom_call.1} parent=1 // pred_fallthru
      _
    %v83 = vld [vmem:[#allocation2] sm:$0xff]
    %v84 = vld [vmem:[#allocation2 + $0x8] sm:$0xff]
    %v85 = vld [vmem:[%s1] sm:$0x1]
    %v86 = vld [vmem:[%s1 + $0x1] sm:$0x1]
    %v87 = vsub.f32 1.0, %v85
    %v88 = vsub.f32 1.0, %v86
    %v89 = vmul.f32 %v87, -1e+09
    %v90 = vmul.f32 %v88, -1e+09
    %v91 = vpack.c.bf16 %v84, %v83
    %v92 = vld [vmem:[%s2] sm:$0xf]
    %v93 = vld [vmem:[%s2 + $0x4] sm:$0xf]
    %v94 = vld [vmem:[%s2 + $0x8] sm:$0xf]
    %v95 = vld [vmem:[%s2 + $0xc] sm:$0xf]
    %v96 = vld [vmem:[#allocation8] sm:$0x1]
    %v97 = vlaneseq
    %v98 = vshrl.u32 %v97, 7
    %v99 = vsub.s32 0, %v98
    %v100 = vrot.slane %v96, %v99
    %v105 = vunpack.c.l.b16 %v92
    %v106 = vunpack.c.l.b16 %v93
    %v107 = vunpack.c.l.b16 %v94
    %v108 = vunpack.c.l.b16 %v95
    %v109 = vpack.c.b16 %v106, %v105
    %v110 = vpack.c.b16 %v108, %v107
    %vm113 = vcmask 261120
    %v115 = vsel %vm113, %v91, 0
    %117 = vmatprep.subr.bf16.mxu0 0
    %118 = vmatpush1.bf16.msra.mxu0 0
    %119 = vmatprep.subr.bf16.mxu0 0
    %120 = vmatpush1.bf16.msra.mxu0 0
    %121 = vmatprep.subr.bf16.mxu0 0
    %122 = vmatpush1.bf16.msra.mxu0 0
    %123 = vmatprep.subr.bf16.mxu0 0
    %124 = vmatpush1.bf16.msra.mxu0 0
    %125 = vmatprep.subr.bf16.mxu0 0
    %126 = vmatpush1.bf16.msra.mxu0 0
    %127 = vmatprep.subr.bf16.mxu0 0
    %128 = vmatpush1.bf16.msra.mxu0 0
    %129 = vmatprep.subr.bf16.mxu0 0
    %130 = vmatpush1.bf16.msra.mxu0 %v110
    %131 = vmatprep.subr.bf16.mxu0 0
    %132 = vmatpush1.bf16.msra.mxu0 %v109
    %133 = vmatprep.subr.bf16.mxu0 0
    %134 = vmatpush2.bf16.msra.mxu0 0
    %135 = vmatprep.subr.bf16.mxu0 0
    %136 = vmatpush2.bf16.msra.mxu0 0
    %137 = vmatprep.subr.bf16.mxu0 0
    %138 = vmatpush2.bf16.msra.mxu0 0
    %139 = vmatprep.subr.bf16.mxu0 0
    %140 = vmatpush2.bf16.msra.mxu0 0
    %141 = vmatprep.subr.bf16.mxu0 0
    %142 = vmatpush2.bf16.msra.mxu0 0
    %143 = vmatprep.subr.bf16.mxu0 0
    %144 = vmatpush2.bf16.msra.mxu0 0
    %145 = vmatprep.subr.bf16.mxu0 0
    %146 = vmatpush2.bf16.msra.mxu0 0
    %147 = vmatprep.subr.bf16.mxu0 0
    %148 = vmatpush2.bf16.msra.mxu0 0
    %149 = vmatprep.mubr.bf16.mxu0 0
    %150 = vmatmul.mubr.bf16.gmra.mxu0 %v115
    %v151 = vpop.f32.mrf.mxu0
    %v152 = vadd.f32 %v100, %v151
    %v153 = vpop.f32.mrf.mxu0
    %v154 = vpop.f32.mrf.mxu0
    %v155 = vadd.f32 %v100, %v154
    %v156 = vpop.f32.mrf.mxu0
    %157 = vdwg.mxu0
    %s158 = scalar_lea.vmem %s2, 16
    %v159 = vld [vmem:[%s158] sm:$0xf]
    %v160 = vld [vmem:[%s158 + $0x4] sm:$0xf]
    %v161 = vld [vmem:[%s158 + $0x8] sm:$0xf]
    %v162 = vld [vmem:[%s158 + $0xc] sm:$0xf]
    %v163 = vld [vmem:[#allocation8 + $0x1] sm:$0x1]
    %v164 = vlaneseq
    %v165 = vshrl.u32 %v164, 7
    %v166 = vsub.s32 0, %v165
    %v167 = vrot.slane %v163, %v166
    %v172 = vunpack.c.l.b16 %v159
    %v173 = vunpack.c.l.b16 %v160
    %v174 = vunpack.c.l.b16 %v161
    %v175 = vunpack.c.l.b16 %v162
    %v176 = vpack.c.b16 %v173, %v172
    %v177 = vpack.c.b16 %v175, %v174
    %180 = vmatprep.subr.bf16.mxu0 0
    %181 = vmatpush1.bf16.msra.mxu0 0
    %182 = vmatprep.subr.bf16.mxu0 0
    %183 = vmatpush1.bf16.msra.mxu0 0
    %184 = vmatprep.subr.bf16.mxu0 0
    %185 = vmatpush1.bf16.msra.mxu0 0
    %186 = vmatprep.subr.bf16.mxu0 0
    %187 = vmatpush1.bf16.msra.mxu0 0
    %188 = vmatprep.subr.bf16.mxu0 0
    %189 = vmatpush1.bf16.msra.mxu0 0
    %190 = vmatprep.subr.bf16.mxu0 0
    %191 = vmatpush1.bf16.msra.mxu0 0
    %192 = vmatprep.subr.bf16.mxu0 0
    %193 = vmatpush1.bf16.msra.mxu0 %v177
    %194 = vmatprep.subr.bf16.mxu0 0
    %195 = vmatpush1.bf16.msra.mxu0 %v176
    %196 = vmatprep.subr.bf16.mxu0 0
    %197 = vmatpush2.bf16.msra.mxu0 0
    %198 = vmatprep.subr.bf16.mxu0 0
    %199 = vmatpush2.bf16.msra.mxu0 0
    %200 = vmatprep.subr.bf16.mxu0 0
    %201 = vmatpush2.bf16.msra.mxu0 0
    %202 = vmatprep.subr.bf16.mxu0 0
    %203 = vmatpush2.bf16.msra.mxu0 0
    %204 = vmatprep.subr.bf16.mxu0 0
    %205 = vmatpush2.bf16.msra.mxu0 0
    %206 = vmatprep.subr.bf16.mxu0 0
    %207 = vmatpush2.bf16.msra.mxu0 0
    %208 = vmatprep.subr.bf16.mxu0 0
    %209 = vmatpush2.bf16.msra.mxu0 0
    %210 = vmatprep.subr.bf16.mxu0 0
    %211 = vmatpush2.bf16.msra.mxu0 0
    %212 = vmatprep.mubr.bf16.mxu0 0
    %213 = vmatmul.mubr.bf16.gmra.mxu0 %v115
    %v214 = vpop.f32.mrf.mxu0
    %v215 = vadd.f32 %v167, %v214
    %v216 = vpop.f32.mrf.mxu0
    %v217 = vpop.f32.mrf.mxu0
    %v218 = vadd.f32 %v167, %v217
    %v219 = vpop.f32.mrf.mxu0
    %220 = vdwg.mxu0
    %s221 = scalar_lea.vmem %s2, 32
    %v222 = vld [vmem:[%s221] sm:$0xf]
    %v223 = vld [vmem:[%s221 + $0x4] sm:$0xf]
    %v224 = vld [vmem:[%s221 + $0x8] sm:$0xf]
    %v225 = vld [vmem:[%s221 + $0xc] sm:$0xf]
    %v226 = vld [vmem:[#allocation8 + $0x2] sm:$0x1]
    %v227 = vlaneseq
    %v228 = vshrl.u32 %v227, 7
    %v229 = vsub.s32 0, %v228
    %v230 = vrot.slane %v226, %v229
    %v235 = vunpack.c.l.b16 %v222
    %v236 = vunpack.c.l.b16 %v223
    %v237 = vunpack.c.l.b16 %v224
    %v238 = vunpack.c.l.b16 %v225
    %v239 = vpack.c.b16 %v236, %v235
    %v240 = vpack.c.b16 %v238, %v237
    %243 = vmatprep.subr.bf16.mxu0 0
    %244 = vmatpush1.bf16.msra.mxu0 0
    %245 = vmatprep.subr.bf16.mxu0 0
    %246 = vmatpush1.bf16.msra.mxu0 0
    %247 = vmatprep.subr.bf16.mxu0 0
    %248 = vmatpush1.bf16.msra.mxu0 0
    %249 = vmatprep.subr.bf16.mxu0 0
    %250 = vmatpush1.bf16.msra.mxu0 0
    %251 = vmatprep.subr.bf16.mxu0 0
    %252 = vmatpush1.bf16.msra.mxu0 0
    %253 = vmatprep.subr.bf16.mxu0 0
    %254 = vmatpush1.bf16.msra.mxu0 0
    %255 = vmatprep.subr.bf16.mxu0 0
    %256 = vmatpush1.bf16.msra.mxu0 %v240
    %257 = vmatprep.subr.bf16.mxu0 0
    %258 = vmatpush1.bf16.msra.mxu0 %v239
    %259 = vmatprep.subr.bf16.mxu0 0
    %260 = vmatpush2.bf16.msra.mxu0 0
    %261 = vmatprep.subr.bf16.mxu0 0
    %262 = vmatpush2.bf16.msra.mxu0 0
    %263 = vmatprep.subr.bf16.mxu0 0
    %264 = vmatpush2.bf16.msra.mxu0 0
    %265 = vmatprep.subr.bf16.mxu0 0
    %266 = vmatpush2.bf16.msra.mxu0 0
    %267 = vmatprep.subr.bf16.mxu0 0
    %268 = vmatpush2.bf16.msra.mxu0 0
    %269 = vmatprep.subr.bf16.mxu0 0
    %270 = vmatpush2.bf16.msra.mxu0 0
    %271 = vmatprep.subr.bf16.mxu0 0
    %272 = vmatpush2.bf16.msra.mxu0 0
    %273 = vmatprep.subr.bf16.mxu0 0
    %274 = vmatpush2.bf16.msra.mxu0 0
    %275 = vmatprep.mubr.bf16.mxu0 0
    %276 = vmatmul.mubr.bf16.gmra.mxu0 %v115
    %v277 = vpop.f32.mrf.mxu0
    %v278 = vadd.f32 %v230, %v277
    %v279 = vpop.f32.mrf.mxu0
    %v280 = vpop.f32.mrf.mxu0
    %v281 = vadd.f32 %v230, %v280
    %v282 = vpop.f32.mrf.mxu0
    %283 = vdwg.mxu0
    %v285 = vsel %vm113, %v152, 0
    %v288 = vsel %vm113, %v215, 0
    %290 = vmatprep.subr.mxu0 0.0
    %291 = vmatpush1.xpose.msra.mxu0 0.0
    %292 = vmatprep.subr.mxu0 0.0
    %293 = vmatpush1.xpose.msra.mxu0 0.0
    %294 = vmatprep.subr.mxu0 0.0
    %295 = vmatpush1.xpose.msra.mxu0 0.0
    %296 = vmatprep.subr.mxu0 0.0
    %297 = vmatpush1.xpose.msra.mxu0 0.0
    %298 = vmatprep.subr.mxu0 0.0
    %299 = vmatpush1.xpose.msra.mxu0 0.0
    %300 = vmatprep.subr.mxu0 0.0
    %301 = vmatpush1.xpose.msra.mxu0 0.0
    %302 = vmatprep.subr.mxu0 0.0
    %303 = vmatpush1.xpose.msra.mxu0 0.0
    %304 = vmatprep.subr.mxu0 0.0
    %305 = vmatpush1.xpose.msra.mxu0 0.0
    %306 = vmatprep.subr.mxu0 0.0
    %307 = vmatpush1.xpose.msra.mxu0 0.0
    %308 = vmatprep.subr.mxu0 0.0
    %309 = vmatpush1.xpose.msra.mxu0 0.0
    %310 = vmatprep.subr.mxu0 0.0
    %311 = vmatpush1.xpose.msra.mxu0 0.0
    %312 = vmatprep.subr.mxu0 0.0
    %313 = vmatpush1.xpose.msra.mxu0 0.0
    %314 = vmatprep.subr.mxu0 0.0
    %315 = vmatpush1.xpose.msra.mxu0 0.0
    %316 = vmatprep.subr.mxu0 0.0
    %317 = vmatpush1.xpose.msra.mxu0 0.0
    %318 = vmatprep.subr.mxu0 0.0
    %319 = vmatpush1.xpose.msra.mxu0 0.0
    %320 = vmatprep.subr.mxu0 0.0
    %321 = vmatpush1.xpose.msra.mxu0 %v288
    %322 = vmatprep.subr.mxu0 0.0
    %323 = vmatpush2.xpose.msra.mxu0 0.0
    %324 = vmatprep.subr.mxu0 0.0
    %325 = vmatpush2.xpose.msra.mxu0 0.0
    %326 = vmatprep.subr.mxu0 0.0
    %327 = vmatpush2.xpose.msra.mxu0 0.0
    %328 = vmatprep.subr.mxu0 0.0
    %329 = vmatpush2.xpose.msra.mxu0 0.0
    %330 = vmatprep.subr.mxu0 0.0
    %331 = vmatpush2.xpose.msra.mxu0 0.0
    %332 = vmatprep.subr.mxu0 0.0
    %333 = vmatpush2.xpose.msra.mxu0 0.0
    %334 = vmatprep.subr.mxu0 0.0
    %335 = vmatpush2.xpose.msra.mxu0 0.0
    %336 = vmatprep.subr.mxu0 0.0
    %337 = vmatpush2.xpose.msra.mxu0 0.0
    %338 = vmatprep.subr.mxu0 0.0
    %339 = vmatpush2.xpose.msra.mxu0 0.0
    %340 = vmatprep.subr.mxu0 0.0
    %341 = vmatpush2.xpose.msra.mxu0 0.0
    %342 = vmatprep.subr.mxu0 0.0
    %343 = vmatpush2.xpose.msra.mxu0 0.0
    %344 = vmatprep.subr.mxu0 0.0
    %345 = vmatpush2.xpose.msra.mxu0 0.0
    %346 = vmatprep.subr.mxu0 0.0
    %347 = vmatpush2.xpose.msra.mxu0 0.0
    %348 = vmatprep.subr.mxu0 0.0
    %349 = vmatpush2.xpose.msra.mxu0 0.0
    %350 = vmatprep.subr.mxu0 0.0
    %351 = vmatpush2.xpose.msra.mxu0 0.0
    %352 = vmatprep.subr.mxu0 0.0
    %353 = vmatpush2.xpose.msra.mxu0 0.0
    %354 = vmatprep.mubr.f32.mxu0 0.0
    %355 = vmatmul.mubr.f32.gmra.mxu0 %v285
    %v356 = vpop.f32.mrf.mxu0
    %v357 = vadd.f32 0.0, %v356
    %v358 = vpop.f32.mrf.mxu0
    %359 = vdwg.mxu0
    %v361 = vsel %vm113, %v155, 0
    %v364 = vsel %vm113, %v218, 0
    %366 = vmatprep.subr.mxu0 0.0
    %367 = vmatpush1.xpose.msra.mxu0 0.0
    %368 = vmatprep.subr.mxu0 0.0
    %369 = vmatpush1.xpose.msra.mxu0 0.0
    %370 = vmatprep.subr.mxu0 0.0
    %371 = vmatpush1.xpose.msra.mxu0 0.0
    %372 = vmatprep.subr.mxu0 0.0
    %373 = vmatpush1.xpose.msra.mxu0 0.0
    %374 = vmatprep.subr.mxu0 0.0
    %375 = vmatpush1.xpose.msra.mxu0 0.0
    %376 = vmatprep.subr.mxu0 0.0
    %377 = vmatpush1.xpose.msra.mxu0 0.0
    %378 = vmatprep.subr.mxu0 0.0
    %379 = vmatpush1.xpose.msra.mxu0 0.0
    %380 = vmatprep.subr.mxu0 0.0
    %381 = vmatpush1.xpose.msra.mxu0 0.0
    %382 = vmatprep.subr.mxu0 0.0
    %383 = vmatpush1.xpose.msra.mxu0 0.0
    %384 = vmatprep.subr.mxu0 0.0
    %385 = vmatpush1.xpose.msra.mxu0 0.0
    %386 = vmatprep.subr.mxu0 0.0
    %387 = vmatpush1.xpose.msra.mxu0 0.0
    %388 = vmatprep.subr.mxu0 0.0
    %389 = vmatpush1.xpose.msra.mxu0 0.0
    %390 = vmatprep.subr.mxu0 0.0
    %391 = vmatpush1.xpose.msra.mxu0 0.0
    %392 = vmatprep.subr.mxu0 0.0
    %393 = vmatpush1.xpose.msra.mxu0 0.0
    %394 = vmatprep.subr.mxu0 0.0
    %395 = vmatpush1.xpose.msra.mxu0 0.0
    %396 = vmatprep.subr.mxu0 0.0
    %397 = vmatpush1.xpose.msra.mxu0 %v364
    %398 = vmatprep.subr.mxu0 0.0
    %399 = vmatpush2.xpose.msra.mxu0 0.0
    %400 = vmatprep.subr.mxu0 0.0
    %401 = vmatpush2.xpose.msra.mxu0 0.0
    %402 = vmatprep.subr.mxu0 0.0
    %403 = vmatpush2.xpose.msra.mxu0 0.0
    %404 = vmatprep.subr.mxu0 0.0
    %405 = vmatpush2.xpose.msra.mxu0 0.0
    %406 = vmatprep.subr.mxu0 0.0
    %407 = vmatpush2.xpose.msra.mxu0 0.0
    %408 = vmatprep.subr.mxu0 0.0
    %409 = vmatpush2.xpose.msra.mxu0 0.0
    %410 = vmatprep.subr.mxu0 0.0
    %411 = vmatpush2.xpose.msra.mxu0 0.0
    %412 = vmatprep.subr.mxu0 0.0
    %413 = vmatpush2.xpose.msra.mxu0 0.0
    %414 = vmatprep.subr.mxu0 0.0
    %415 = vmatpush2.xpose.msra.mxu0 0.0
    %416 = vmatprep.subr.mxu0 0.0
    %417 = vmatpush2.xpose.msra.mxu0 0.0
    %418 = vmatprep.subr.mxu0 0.0
    %419 = vmatpush2.xpose.msra.mxu0 0.0
    %420 = vmatprep.subr.mxu0 0.0
    %421 = vmatpush2.xpose.msra.mxu0 0.0
    %422 = vmatprep.subr.mxu0 0.0
    %423 = vmatpush2.xpose.msra.mxu0 0.0
    %424 = vmatprep.subr.mxu0 0.0
    %425 = vmatpush2.xpose.msra.mxu0 0.0
    %426 = vmatprep.subr.mxu0 0.0
    %427 = vmatpush2.xpose.msra.mxu0 0.0
    %428 = vmatprep.subr.mxu0 0.0
    %429 = vmatpush2.xpose.msra.mxu0 0.0
    %430 = vmatprep.mubr.f32.mxu0 0.0
    %431 = vmatmul.mubr.f32.gmra.mxu0 %v361
    %v432 = vpop.f32.mrf.mxu0
    %v433 = vadd.f32 0.0, %v432
    %v434 = vpop.f32.mrf.mxu0
    %435 = vdwg.mxu0
    %v436 = vmul.f32 %v357, 0.17677669
    %v437 = vmul.f32 %v433, 0.17677669
    %v440 = vlaneseq
    %v441 = vshrl.u32 %v440, 7
    %v442 = vsub.s32 0, %v441
    %v443 = vrot.slane %v89, %v442
    %v444 = vlaneseq
    %v445 = vshrl.u32 %v444, 7
    %v446 = vsub.s32 0, %v445
    %v447 = vrot.slane %v90, %v446
    %v450 = vadd.f32 %v436, %v443
    %v451 = vadd.f32 %v437, %v447
    %vm452 = vcmask 64512
    %v453 = vsel %vm452, %v450, -inf
    %454 = vmax.xlane.f32.xlu0 %v453
    %v455 = vpop.xlane.xlu0 %454
    %v456 = vsel %vm452, %v451, -inf
    %457 = vmax.xlane.f32.xlu0 %v456
    %v458 = vpop.xlane.xlu0 %457
    %v459 = vsub.f32 %v450, %v455
    %v460 = vsub.f32 %v451, %v458
    %v461 = vmul.f32 %v459, 1.442695
    %v462 = vpow.pop %v461
    %v463 = vmul.f32 %v460, 1.442695
    %v464 = vpow.pop %v463
    %v465 = vsel %vm452, %v462, 0.0
    %466 = vadd.xlane.f32.xlu0 %v465
    %v467 = vpop.xlane.xlu0 %466
    %v468 = vsel %vm452, %v464, 0.0
    %469 = vadd.xlane.f32.xlu0 %v468
    %v470 = vpop.xlane.xlu0 %469
    %v471 = vrcp.pop %v467
    %v472 = vrcp.pop %v470
    %v473 = vmul.f32 %v462, %v471
    %v474 = vmul.f32 %v464, %v472
    %v476 = vsel %vm452, %v473, 0
    %478 = vmatprep.subr.mxu0 0.0
    %479 = vmatpush1.msra.mxu0 0.0
    %480 = vmatprep.subr.mxu0 0.0
    %481 = vmatpush1.msra.mxu0 0.0
    %482 = vmatprep.subr.mxu0 0.0
    %483 = vmatpush1.msra.mxu0 0.0
    %484 = vmatprep.subr.mxu0 0.0
    %485 = vmatpush1.msra.mxu0 0.0
    %486 = vmatprep.subr.mxu0 0.0
    %487 = vmatpush1.msra.mxu0 0.0
    %488 = vmatprep.subr.mxu0 0.0
    %489 = vmatpush1.msra.mxu0 0.0
    %490 = vmatprep.subr.mxu0 0.0
    %491 = vmatpush1.msra.mxu0 0.0
    %492 = vmatprep.subr.mxu0 0.0
    %493 = vmatpush1.msra.mxu0 0.0
    %494 = vmatprep.subr.mxu0 0.0
    %495 = vmatpush1.msra.mxu0 0.0
    %496 = vmatprep.subr.mxu0 0.0
    %497 = vmatpush1.msra.mxu0 0.0
    %498 = vmatprep.subr.mxu0 0.0
    %499 = vmatpush1.msra.mxu0 0.0
    %500 = vmatprep.subr.mxu0 0.0
    %501 = vmatpush1.msra.mxu0 0.0
    %502 = vmatprep.subr.mxu0 0.0
    %503 = vmatpush1.msra.mxu0 0.0
    %504 = vmatprep.subr.mxu0 0.0
    %505 = vmatpush1.msra.mxu0 0.0
    %506 = vmatprep.subr.mxu0 0.0
    %507 = vmatpush1.msra.mxu0 0.0
    %508 = vmatprep.subr.mxu0 0.0
    %509 = vmatpush1.msra.mxu0 %v278
    %510 = vmatprep.subr.mxu0 0.0
    %511 = vmatpush2.msra.mxu0 0.0
    %512 = vmatprep.subr.mxu0 0.0
    %513 = vmatpush2.msra.mxu0 0.0
    %514 = vmatprep.subr.mxu0 0.0
    %515 = vmatpush2.msra.mxu0 0.0
    %516 = vmatprep.subr.mxu0 0.0
    %517 = vmatpush2.msra.mxu0 0.0
    %518 = vmatprep.subr.mxu0 0.0
    %519 = vmatpush2.msra.mxu0 0.0
    %520 = vmatprep.subr.mxu0 0.0
    %521 = vmatpush2.msra.mxu0 0.0
    %522 = vmatprep.subr.mxu0 0.0
    %523 = vmatpush2.msra.mxu0 0.0
    %524 = vmatprep.subr.mxu0 0.0
    %525 = vmatpush2.msra.mxu0 0.0
    %526 = vmatprep.subr.mxu0 0.0
    %527 = vmatpush2.msra.mxu0 0.0
    %528 = vmatprep.subr.mxu0 0.0
    %529 = vmatpush2.msra.mxu0 0.0
    %530 = vmatprep.subr.mxu0 0.0
    %531 = vmatpush2.msra.mxu0 0.0
    %532 = vmatprep.subr.mxu0 0.0
    %533 = vmatpush2.msra.mxu0 0.0
    %534 = vmatprep.subr.mxu0 0.0
    %535 = vmatpush2.msra.mxu0 0.0
    %536 = vmatprep.subr.mxu0 0.0
    %537 = vmatpush2.msra.mxu0 0.0
    %538 = vmatprep.subr.mxu0 0.0
    %539 = vmatpush2.msra.mxu0 0.0
    %540 = vmatprep.subr.mxu0 0.0
    %541 = vmatpush2.msra.mxu0 0.0
    %542 = vmatprep.mubr.f32.mxu0 0.0
    %543 = vmatmul.mubr.f32.gmra.mxu0 %v476
    %v544 = vpop.f32.mrf.mxu0
    %v545 = vadd.f32 0.0, %v544
    %v546 = vpop.f32.mrf.mxu0
    %547 = vdwg.mxu0
    %v549 = vsel %vm452, %v474, 0
    %551 = vmatprep.subr.mxu0 0.0
    %552 = vmatpush1.msra.mxu0 0.0
    %553 = vmatprep.subr.mxu0 0.0
    %554 = vmatpush1.msra.mxu0 0.0
    %555 = vmatprep.subr.mxu0 0.0
    %556 = vmatpush1.msra.mxu0 0.0
    %557 = vmatprep.subr.mxu0 0.0
    %558 = vmatpush1.msra.mxu0 0.0
    %559 = vmatprep.subr.mxu0 0.0
    %560 = vmatpush1.msra.mxu0 0.0
    %561 = vmatprep.subr.mxu0 0.0
    %562 = vmatpush1.msra.mxu0 0.0
    %563 = vmatprep.subr.mxu0 0.0
    %564 = vmatpush1.msra.mxu0 0.0
    %565 = vmatprep.subr.mxu0 0.0
    %566 = vmatpush1.msra.mxu0 0.0
    %567 = vmatprep.subr.mxu0 0.0
    %568 = vmatpush1.msra.mxu0 0.0
    %569 = vmatprep.subr.mxu0 0.0
    %570 = vmatpush1.msra.mxu0 0.0
    %571 = vmatprep.subr.mxu0 0.0
    %572 = vmatpush1.msra.mxu0 0.0
    %573 = vmatprep.subr.mxu0 0.0
    %574 = vmatpush1.msra.mxu0 0.0
    %575 = vmatprep.subr.mxu0 0.0
    %576 = vmatpush1.msra.mxu0 0.0
    %577 = vmatprep.subr.mxu0 0.0
    %578 = vmatpush1.msra.mxu0 0.0
    %579 = vmatprep.subr.mxu0 0.0
    %580 = vmatpush1.msra.mxu0 0.0
    %581 = vmatprep.subr.mxu0 0.0
    %582 = vmatpush1.msra.mxu0 %v281
    %583 = vmatprep.subr.mxu0 0.0
    %584 = vmatpush2.msra.mxu0 0.0
    %585 = vmatprep.subr.mxu0 0.0
    %586 = vmatpush2.msra.mxu0 0.0
    %587 = vmatprep.subr.mxu0 0.0
    %588 = vmatpush2.msra.mxu0 0.0
    %589 = vmatprep.subr.mxu0 0.0
    %590 = vmatpush2.msra.mxu0 0.0
    %591 = vmatprep.subr.mxu0 0.0
    %592 = vmatpush2.msra.mxu0 0.0
    %593 = vmatprep.subr.mxu0 0.0
    %594 = vmatpush2.msra.mxu0 0.0
    %595 = vmatprep.subr.mxu0 0.0
    %596 = vmatpush2.msra.mxu0 0.0
    %597 = vmatprep.subr.mxu0 0.0
    %598 = vmatpush2.msra.mxu0 0.0
    %599 = vmatprep.subr.mxu0 0.0
    %600 = vmatpush2.msra.mxu0 0.0
    %601 = vmatprep.subr.mxu0 0.0
    %602 = vmatpush2.msra.mxu0 0.0
    %603 = vmatprep.subr.mxu0 0.0
    %604 = vmatpush2.msra.mxu0 0.0
    %605 = vmatprep.subr.mxu0 0.0
    %606 = vmatpush2.msra.mxu0 0.0
    %607 = vmatprep.subr.mxu0 0.0
    %608 = vmatpush2.msra.mxu0 0.0
    %609 = vmatprep.subr.mxu0 0.0
    %610 = vmatpush2.msra.mxu0 0.0
    %611 = vmatprep.subr.mxu0 0.0
    %612 = vmatpush2.msra.mxu0 0.0
    %613 = vmatprep.subr.mxu0 0.0
    %614 = vmatpush2.msra.mxu0 0.0
    %615 = vmatprep.mubr.f32.mxu0 0.0
    %616 = vmatmul.mubr.f32.gmra.mxu0 %v549
    %v617 = vpop.f32.mrf.mxu0
    %v618 = vadd.f32 0.0, %v617
    %v619 = vpop.f32.mrf.mxu0
    %620 = vdwg.mxu0
    %v621 = vpack.c.bf16 %v618, %v545
    %v622 = vld [vmem:[#allocation5] sm:$0xf]
    %v623 = vld [vmem:[#allocation5 + $0x4] sm:$0xf]
    %v624 = vld [vmem:[#allocation5 + $0x8] sm:$0xf]
    %v625 = vld [vmem:[#allocation5 + $0xc] sm:$0xf]
    %v626 = vld [vmem:[#allocation8 + $0x3] sm:$0x1]
    %v627 = vlaneseq
    %v628 = vshrl.u32 %v627, 7
    %v629 = vsub.s32 0, %v628
    %v630 = vrot.slane %v626, %v629
    %v635 = vunpack.c.l.b16 %v622
    %v636 = vunpack.c.l.b16 %v623
    %v637 = vunpack.c.l.b16 %v624
    %v638 = vunpack.c.l.b16 %v625
    %v639 = vpack.c.b16 %v636, %v635
    %v640 = vpack.c.b16 %v638, %v637
    %v644 = vsel %vm113, %v621, 0
    %646 = vmatprep.subr.bf16.mxu0 0
    %647 = vmatpush1.bf16.msra.mxu0 0
    %648 = vmatprep.subr.bf16.mxu0 0
    %649 = vmatpush1.bf16.msra.mxu0 0
    %650 = vmatprep.subr.bf16.mxu0 0
    %651 = vmatpush1.bf16.msra.mxu0 0
    %652 = vmatprep.subr.bf16.mxu0 0
    %653 = vmatpush1.bf16.msra.mxu0 0
    %654 = vmatprep.subr.bf16.mxu0 0
    %655 = vmatpush1.bf16.msra.mxu0 0
    %656 = vmatprep.subr.bf16.mxu0 0
    %657 = vmatpush1.bf16.msra.mxu0 0
    %658 = vmatprep.subr.bf16.mxu0 0
    %659 = vmatpush1.bf16.msra.mxu0 %v640
    %660 = vmatprep.subr.bf16.mxu0 0
    %661 = vmatpush1.bf16.msra.mxu0 %v639
    %662 = vmatprep.subr.bf16.mxu0 0
    %663 = vmatpush2.bf16.msra.mxu0 0
    %664 = vmatprep.subr.bf16.mxu0 0
    %665 = vmatpush2.bf16.msra.mxu0 0
    %666 = vmatprep.subr.bf16.mxu0 0
    %667 = vmatpush2.bf16.msra.mxu0 0
    %668 = vmatprep.subr.bf16.mxu0 0
    %669 = vmatpush2.bf16.msra.mxu0 0
    %670 = vmatprep.subr.bf16.mxu0 0
    %671 = vmatpush2.bf16.msra.mxu0 0
    %672 = vmatprep.subr.bf16.mxu0 0
    %673 = vmatpush2.bf16.msra.mxu0 0
    %674 = vmatprep.subr.bf16.mxu0 0
    %675 = vmatpush2.bf16.msra.mxu0 0
    %676 = vmatprep.subr.bf16.mxu0 0
    %677 = vmatpush2.bf16.msra.mxu0 0
    %678 = vmatprep.mubr.bf16.mxu0 0
    %679 = vmatmul.mubr.bf16.gmra.mxu0 %v644
    %v680 = vpop.f32.mrf.mxu0
    %v681 = vadd.f32 %v630, %v680
    %v682 = vpop.f32.mrf.mxu0
    %v683 = vpop.f32.mrf.mxu0
    %v684 = vadd.f32 %v630, %v683
    %v685 = vpop.f32.mrf.mxu0
    %686 = vdwg.mxu0
    %v687 = vadd.f32 %v83, %v681
    %v688 = vadd.f32 %v84, %v684
    %v689 = vld [vmem:[#allocation8 + $0x4] sm:$0x1]
    %v690 = vld [vmem:[#allocation8 + $0x5] sm:$0x1]
    %v691 = vsel %vm113, %v687, 0.0
    %692 = vadd.xlane.f32.xlu0 %v691
    %v693 = vpop.xlane.xlu0 %692
    %v694 = vsel %vm113, %v688, 0.0
    %695 = vadd.xlane.f32.xlu0 %v694
    %v696 = vpop.xlane.xlu0 %695
    %v697 = vrcp.pop 32.0
    %v698 = vmul.f32 %v693, %v697
    %v699 = vmul.f32 %v696, %v697
    %v700 = vsub.f32 %v687, %v698
    %v701 = vsub.f32 %v688, %v699
    %v702 = vmul.f32 %v700, %v700
    %v703 = vmul.f32 %v701, %v701
    %v704 = vsel %vm113, %v702, 0.0
    %705 = vadd.xlane.f32.xlu0 %v704
    %v706 = vpop.xlane.xlu0 %705
    %v707 = vsel %vm113, %v703, 0.0
    %708 = vadd.xlane.f32.xlu0 %v707
    %v709 = vpop.xlane.xlu0 %708
    %v710 = vmul.f32 %v706, %v697
    %v711 = vmul.f32 %v709, %v697
    %v712 = vadd.f32 %v710, 1e-05
    %v713 = vadd.f32 %v711, 1e-05
    %v714 = vrsqrt.pop %v712
    %v715 = vrsqrt.pop %v713
    %v716 = vmul.f32 %v700, %v714
    %v717 = vmul.f32 %v701, %v715
    %v718 = vlaneseq
    %v719 = vshrl.u32 %v718, 7
    %v720 = vsub.s32 0, %v719
    %v721 = vrot.slane %v689, %v720
    %v722 = vmul.f32 %v716, %v721
    %v723 = vmul.f32 %v717, %v721
    %v724 = vlaneseq
    %v725 = vshrl.u32 %v724, 7
    %v726 = vsub.s32 0, %v725
    %v727 = vrot.slane %v690, %v726
    %v728 = vadd.f32 %v722, %v727
    %v729 = vadd.f32 %v723, %v727
    %v730 = vpack.c.bf16 %v729, %v728
    %v731 = vld [vmem:[#allocation7] sm:$0xf]
    %v732 = vld [vmem:[#allocation7 + $0x4] sm:$0xf]
    %v733 = vld [vmem:[#allocation7 + $0x8] sm:$0xf]
    %v734 = vld [vmem:[#allocation7 + $0xc] sm:$0xf]
    %v735 = vld [vmem:[#allocation8 + $0x6] sm:$0x1]
    %v736 = vlaneseq
    %v737 = vshrl.u32 %v736, 7
    %v738 = vsub.s32 0, %v737
    %v739 = vrot.slane %v735, %v738
    %v744 = vunpack.c.l.b16 %v731
    %v745 = vunpack.c.l.b16 %v732
    %v746 = vunpack.c.l.b16 %v733
    %v747 = vunpack.c.l.b16 %v734
    %v748 = vpack.c.b16 %v745, %v744
    %v749 = vpack.c.b16 %v747, %v746
    %v753 = vsel %vm113, %v730, 0
    %755 = vmatprep.subr.bf16.mxu0 0
    %756 = vmatpush1.bf16.msra.mxu0 0
    %757 = vmatprep.subr.bf16.mxu0 0
    %758 = vmatpush1.bf16.msra.mxu0 0
    %759 = vmatprep.subr.bf16.mxu0 0
    %760 = vmatpush1.bf16.msra.mxu0 0
    %761 = vmatprep.subr.bf16.mxu0 0
    %762 = vmatpush1.bf16.msra.mxu0 0
    %763 = vmatprep.subr.bf16.mxu0 0
    %764 = vmatpush1.bf16.msra.mxu0 0
    %765 = vmatprep.subr.bf16.mxu0 0
    %766 = vmatpush1.bf16.msra.mxu0 0
    %767 = vmatprep.subr.bf16.mxu0 0
    %768 = vmatpush1.bf16.msra.mxu0 %v749
    %769 = vmatprep.subr.bf16.mxu0 0
    %770 = vmatpush1.bf16.msra.mxu0 %v748
    %771 = vmatprep.subr.bf16.mxu0 0
    %772 = vmatpush2.bf16.msra.mxu0 0
    %773 = vmatprep.subr.bf16.mxu0 0
    %774 = vmatpush2.bf16.msra.mxu0 0
    %775 = vmatprep.subr.bf16.mxu0 0
    %776 = vmatpush2.bf16.msra.mxu0 0
    %777 = vmatprep.subr.bf16.mxu0 0
    %778 = vmatpush2.bf16.msra.mxu0 0
    %779 = vmatprep.subr.bf16.mxu0 0
    %780 = vmatpush2.bf16.msra.mxu0 0
    %781 = vmatprep.subr.bf16.mxu0 0
    %782 = vmatpush2.bf16.msra.mxu0 0
    %783 = vmatprep.subr.bf16.mxu0 0
    %784 = vmatpush2.bf16.msra.mxu0 0
    %785 = vmatprep.subr.bf16.mxu0 0
    %786 = vmatpush2.bf16.msra.mxu0 0
    %787 = vmatprep.mubr.bf16.mxu0 0
    %788 = vmatmul.mubr.bf16.gmra.mxu0 %v753
    %v789 = vpop.f32.mrf.mxu0
    %v790 = vadd.f32 %v739, %v789
    %v791 = vpop.f32.mrf.mxu0
    %v792 = vpop.f32.mrf.mxu0
    %v793 = vadd.f32 %v739, %v792
    %v794 = vpop.f32.mrf.mxu0
    %795 = vdwg.mxu0
    %v796 = vmul.f32 %v790, %v790
    %v797 = vmul.f32 %v793, %v793
    %v798 = vmul.f32 %v790, %v796
    %v799 = vmul.f32 %v793, %v797
    %v800 = vmul.f32 %v798, 0.044715
    %v801 = vmul.f32 %v799, 0.044715
    %v802 = vadd.f32 %v790, %v800
    %v803 = vadd.f32 %v793, %v801
    %v804 = vmul.f32 %v802, 0.7978846
    %v805 = vmul.f32 %v803, 0.7978846
    %v806 = vtanh.pop %v804
    %v807 = vtanh.pop %v805
    %v808 = vadd.f32 %v806, 1.0
    %v809 = vadd.f32 %v807, 1.0
    %v810 = vmul.f32 %v808, 0.5
    %v811 = vmul.f32 %v809, 0.5
    %v812 = vmul.f32 %v790, %v810
    %v813 = vmul.f32 %v793, %v811
    %v814 = vpack.c.bf16 %v813, %v812
    %v815 = vld [vmem:[%s5] sm:$0xf]
    %v816 = vld [vmem:[%s5 + $0x4] sm:$0xf]
    %v817 = vld [vmem:[%s5 + $0x8] sm:$0xf]
    %v818 = vld [vmem:[%s5 + $0xc] sm:$0xf]
    %v819 = vld [vmem:[%s5 + $0x10] sm:$0xf]
    %v820 = vld [vmem:[%s5 + $0x14] sm:$0xf]
    %v821 = vld [vmem:[%s5 + $0x18] sm:$0xf]
    %v822 = vld [vmem:[%s5 + $0x1c] sm:$0xf]
    %v823 = vld [vmem:[#allocation8 + $0x7] sm:$0x1]
    %v824 = vlaneseq
    %v825 = vshrl.u32 %v824, 7
    %v826 = vsub.s32 0, %v825
    %v827 = vrot.slane %v823, %v826
    %v836 = vunpack.c.l.b16 %v815
    %v837 = vunpack.c.l.b16 %v816
    %v838 = vunpack.c.l.b16 %v817
    %v839 = vunpack.c.l.b16 %v818
    %v840 = vunpack.c.l.b16 %v819
    %v841 = vunpack.c.l.b16 %v820
    %v842 = vunpack.c.l.b16 %v821
    %v843 = vunpack.c.l.b16 %v822
    %v844 = vpack.c.b16 %v837, %v836
    %v845 = vpack.c.b16 %v839, %v838
    %v846 = vpack.c.b16 %v841, %v840
    %v847 = vpack.c.b16 %v843, %v842
    %vm852 = vcmask 523264
    %v854 = vsel %vm852, %v814, 0
    %856 = vmatprep.subr.bf16.mxu0 0
    %857 = vmatpush1.bf16.msra.mxu0 0
    %858 = vmatprep.subr.bf16.mxu0 0
    %859 = vmatpush1.bf16.msra.mxu0 0
    %860 = vmatprep.subr.bf16.mxu0 0
    %861 = vmatpush1.bf16.msra.mxu0 0
    %862 = vmatprep.subr.bf16.mxu0 0
    %863 = vmatpush1.bf16.msra.mxu0 0
    %864 = vmatprep.subr.bf16.mxu0 0
    %865 = vmatpush1.bf16.msra.mxu0 %v847
    %866 = vmatprep.subr.bf16.mxu0 0
    %867 = vmatpush1.bf16.msra.mxu0 %v846
    %868 = vmatprep.subr.bf16.mxu0 0
    %869 = vmatpush1.bf16.msra.mxu0 %v845
    %870 = vmatprep.subr.bf16.mxu0 0
    %871 = vmatpush1.bf16.msra.mxu0 %v844
    %872 = vmatprep.subr.bf16.mxu0 0
    %873 = vmatpush2.bf16.msra.mxu0 0
    %874 = vmatprep.subr.bf16.mxu0 0
    %875 = vmatpush2.bf16.msra.mxu0 0
    %876 = vmatprep.subr.bf16.mxu0 0
    %877 = vmatpush2.bf16.msra.mxu0 0
    %878 = vmatprep.subr.bf16.mxu0 0
    %879 = vmatpush2.bf16.msra.mxu0 0
    %880 = vmatprep.subr.bf16.mxu0 0
    %881 = vmatpush2.bf16.msra.mxu0 0
    %882 = vmatprep.subr.bf16.mxu0 0
    %883 = vmatpush2.bf16.msra.mxu0 0
    %884 = vmatprep.subr.bf16.mxu0 0
    %885 = vmatpush2.bf16.msra.mxu0 0
    %886 = vmatprep.subr.bf16.mxu0 0
    %887 = vmatpush2.bf16.msra.mxu0 0
    %888 = vmatprep.mubr.bf16.mxu0 0
    %889 = vmatmul.mubr.bf16.gmra.mxu0 %v854
    %v890 = vpop.f32.mrf.mxu0
    %v891 = vadd.f32 %v827, %v890
    %v892 = vpop.f32.mrf.mxu0
    %v893 = vpop.f32.mrf.mxu0
    %v894 = vadd.f32 %v827, %v893
    %v895 = vpop.f32.mrf.mxu0
    %896 = vdwg.mxu0
    %v897 = vadd.f32 %v728, %v891
    %v898 = vadd.f32 %v729, %v894
    %v899 = vld [vmem:[#allocation8 + $0x8] sm:$0x1]
    %v900 = vld [vmem:[#allocation8 + $0x9] sm:$0x1]
    %v901 = vsel %vm113, %v897, 0.0
    %902 = vadd.xlane.f32.xlu0 %v901
    %v903 = vpop.xlane.xlu0 %902
    %v904 = vsel %vm113, %v898, 0.0
    %905 = vadd.xlane.f32.xlu0 %v904
    %v906 = vpop.xlane.xlu0 %905
    %v907 = vmul.f32 %v903, %v697
    %v908 = vmul.f32 %v906, %v697
    %v909 = vsub.f32 %v897, %v907
    %v910 = vsub.f32 %v898, %v908
    %v911 = vmul.f32 %v909, %v909
    %v912 = vmul.f32 %v910, %v910
    %v913 = vsel %vm113, %v911, 0.0
    %914 = vadd.xlane.f32.xlu0 %v913
    %v915 = vpop.xlane.xlu0 %914
    %v916 = vsel %vm113, %v912, 0.0
    %917 = vadd.xlane.f32.xlu0 %v916
    %v918 = vpop.xlane.xlu0 %917
    %v919 = vmul.f32 %v915, %v697
    %v920 = vmul.f32 %v918, %v697
    %v921 = vadd.f32 %v919, 1e-05
    %v922 = vadd.f32 %v920, 1e-05
    %v923 = vrsqrt.pop %v921
    %v924 = vrsqrt.pop %v922
    %v925 = vmul.f32 %v909, %v923
    %v926 = vmul.f32 %v910, %v924
    %v927 = vlaneseq
    %v928 = vshrl.u32 %v927, 7
    %v929 = vsub.s32 0, %v928
    %v930 = vrot.slane %v899, %v929
    %v931 = vmul.f32 %v925, %v930
    %v932 = vmul.f32 %v926, %v930
    %v933 = vlaneseq
    %v934 = vshrl.u32 %v933, 7
    %v935 = vsub.s32 0, %v934
    %v936 = vrot.slane %v900, %v935
    %v937 = vadd.f32 %v931, %v936
    %v938 = vadd.f32 %v932, %v936
    %v939 = vpack.c.bf16 %v938, %v937
    %s940 = scalar_lea.vmem %s2, 48
    %v941 = vld [vmem:[%s940] sm:$0xf]
    %v942 = vld [vmem:[%s940 + $0x4] sm:$0xf]
    %v943 = vld [vmem:[%s940 + $0x8] sm:$0xf]
    %v944 = vld [vmem:[%s940 + $0xc] sm:$0xf]
    %v945 = vld [vmem:[#allocation8 + $0xa] sm:$0x1]
    %v946 = vlaneseq
    %v947 = vshrl.u32 %v946, 7
    %v948 = vsub.s32 0, %v947
    %v949 = vrot.slane %v945, %v948
    %v954 = vunpack.c.l.b16 %v941
    %v955 = vunpack.c.l.b16 %v942
    %v956 = vunpack.c.l.b16 %v943
    %v957 = vunpack.c.l.b16 %v944
    %v958 = vpack.c.b16 %v955, %v954
    %v959 = vpack.c.b16 %v957, %v956
    %v963 = vsel %vm113, %v939, 0
    %965 = vmatprep.subr.bf16.mxu0 0
    %966 = vmatpush1.bf16.msra.mxu0 0
    %967 = vmatprep.subr.bf16.mxu0 0
    %968 = vmatpush1.bf16.msra.mxu0 0
    %969 = vmatprep.subr.bf16.mxu0 0
    %970 = vmatpush1.bf16.msra.mxu0 0
    %971 = vmatprep.subr.bf16.mxu0 0
    %972 = vmatpush1.bf16.msra.mxu0 0
    %973 = vmatprep.subr.bf16.mxu0 0
    %974 = vmatpush1.bf16.msra.mxu0 0
    %975 = vmatprep.subr.bf16.mxu0 0
    %976 = vmatpush1.bf16.msra.mxu0 0
    %977 = vmatprep.subr.bf16.mxu0 0
    %978 = vmatpush1.bf16.msra.mxu0 %v959
    %979 = vmatprep.subr.bf16.mxu0 0
    %980 = vmatpush1.bf16.msra.mxu0 %v958
    %981 = vmatprep.subr.bf16.mxu0 0
    %982 = vmatpush2.bf16.msra.mxu0 0
    %983 = vmatprep.subr.bf16.mxu0 0
    %984 = vmatpush2.bf16.msra.mxu0 0
    %985 = vmatprep.subr.bf16.mxu0 0
    %986 = vmatpush2.bf16.msra.mxu0 0
    %987 = vmatprep.subr.bf16.mxu0 0
    %988 = vmatpush2.bf16.msra.mxu0 0
    %989 = vmatprep.subr.bf16.mxu0 0
    %990 = vmatpush2.bf16.msra.mxu0 0
    %991 = vmatprep.subr.bf16.mxu0 0
    %992 = vmatpush2.bf16.msra.mxu0 0
    %993 = vmatprep.subr.bf16.mxu0 0
    %994 = vmatpush2.bf16.msra.mxu0 0
    %995 = vmatprep.subr.bf16.mxu0 0
    %996 = vmatpush2.bf16.msra.mxu0 0
    %997 = vmatprep.mubr.bf16.mxu0 0
    %998 = vmatmul.mubr.bf16.gmra.mxu0 %v963
    %v999 = vpop.f32.mrf.mxu0
    %v1000 = vadd.f32 %v949, %v999
    %v1001 = vpop.f32.mrf.mxu0
    %v1002 = vpop.f32.mrf.mxu0
    %v1003 = vadd.f32 %v949, %v1002
    %v1004 = vpop.f32.mrf.mxu0
    %1005 = vdwg.mxu0
    %s1006 = scalar_lea.vmem %s2, 64
    %v1007 = vld [vmem:[%s1006] sm:$0xf]
    %v1008 = vld [vmem:[%s1006 + $0x4] sm:$0xf]
    %v1009 = vld [vmem:[%s1006 + $0x8] sm:$0xf]
    %v1010 = vld [vmem:[%s1006 + $0xc] sm:$0xf]
    %v1011 = vld [vmem:[#allocation8 + $0xb] sm:$0x1]
    %v1012 = vlaneseq
    %v1013 = vshrl.u32 %v1012, 7
    %v1014 = vsub.s32 0, %v1013
    %v1015 = vrot.slane %v1011, %v1014
    %v1020 = vunpack.c.l.b16 %v1007
    %v1021 = vunpack.c.l.b16 %v1008
    %v1022 = vunpack.c.l.b16 %v1009
    %v1023 = vunpack.c.l.b16 %v1010
    %v1024 = vpack.c.b16 %v1021, %v1020
    %v1025 = vpack.c.b16 %v1023, %v1022
    %1028 = vmatprep.subr.bf16.mxu0 0
    %1029 = vmatpush1.bf16.msra.mxu0 0
    %1030 = vmatprep.subr.bf16.mxu0 0
    %1031 = vmatpush1.bf16.msra.mxu0 0
    %1032 = vmatprep.subr.bf16.mxu0 0
    %1033 = vmatpush1.bf16.msra.mxu0 0
    %1034 = vmatprep.subr.bf16.mxu0 0
    %1035 = vmatpush1.bf16.msra.mxu0 0
    %1036 = vmatprep.subr.bf16.mxu0 0
    %1037 = vmatpush1.bf16.msra.mxu0 0
    %1038 = vmatprep.subr.bf16.mxu0 0
    %1039 = vmatpush1.bf16.msra.mxu0 0
    %1040 = vmatprep.subr.bf16.mxu0 0
    %1041 = vmatpush1.bf16.msra.mxu0 %v1025
    %1042 = vmatprep.subr.bf16.mxu0 0
    %1043 = vmatpush1.bf16.msra.mxu0 %v1024
    %1044 = vmatprep.subr.bf16.mxu0 0
    %1045 = vmatpush2.bf16.msra.mxu0 0
    %1046 = vmatprep.subr.bf16.mxu0 0
    %1047 = vmatpush2.bf16.msra.mxu0 0
    %1048 = vmatprep.subr.bf16.mxu0 0
    %1049 = vmatpush2.bf16.msra.mxu0 0
    %1050 = vmatprep.subr.bf16.mxu0 0
    %1051 = vmatpush2.bf16.msra.mxu0 0
    %1052 = vmatprep.subr.bf16.mxu0 0
    %1053 = vmatpush2.bf16.msra.mxu0 0
    %1054 = vmatprep.subr.bf16.mxu0 0
    %1055 = vmatpush2.bf16.msra.mxu0 0
    %1056 = vmatprep.subr.bf16.mxu0 0
    %1057 = vmatpush2.bf16.msra.mxu0 0
    %1058 = vmatprep.subr.bf16.mxu0 0
    %1059 = vmatpush2.bf16.msra.mxu0 0
    %1060 = vmatprep.mubr.bf16.mxu0 0
    %1061 = vmatmul.mubr.bf16.gmra.mxu0 %v963
    %v1062 = vpop.f32.mrf.mxu0
    %v1063 = vadd.f32 %v1015, %v1062
    %v1064 = vpop.f32.mrf.mxu0
    %v1065 = vpop.f32.mrf.mxu0
    %v1066 = vadd.f32 %v1015, %v1065
    %v1067 = vpop.f32.mrf.mxu0
    %1068 = vdwg.mxu0
    %s1069 = scalar_lea.vmem %s2, 80
    %v1070 = vld [vmem:[%s1069] sm:$0xf]
    %v1071 = vld [vmem:[%s1069 + $0x4] sm:$0xf]
    %v1072 = vld [vmem:[%s1069 + $0x8] sm:$0xf]
    %v1073 = vld [vmem:[%s1069 + $0xc] sm:$0xf]
    %v1074 = vld [vmem:[#allocation8 + $0xc] sm:$0x1]
    %v1075 = vlaneseq
    %v1076 = vshrl.u32 %v1075, 7
    %v1077 = vsub.s32 0, %v1076
    %v1078 = vrot.slane %v1074, %v1077
    %v1083 = vunpack.c.l.b16 %v1070
    %v1084 = vunpack.c.l.b16 %v1071
    %v1085 = vunpack.c.l.b16 %v1072
    %v1086 = vunpack.c.l.b16 %v1073
    %v1087 = vpack.c.b16 %v1084, %v1083
    %v1088 = vpack.c.b16 %v1086, %v1085
    %1091 = vmatprep.subr.bf16.mxu0 0
    %1092 = vmatpush1.bf16.msra.mxu0 0
    %1093 = vmatprep.subr.bf16.mxu0 0
    %1094 = vmatpush1.bf16.msra.mxu0 0
    %1095 = vmatprep.subr.bf16.mxu0 0
    %1096 = vmatpush1.bf16.msra.mxu0 0
    %1097 = vmatprep.subr.bf16.mxu0 0
    %1098 = vmatpush1.bf16.msra.mxu0 0
    %1099 = vmatprep.subr.bf16.mxu0 0
    %1100 = vmatpush1.bf16.msra.mxu0 0
    %1101 = vmatprep.subr.bf16.mxu0 0
    %1102 = vmatpush1.bf16.msra.mxu0 0
    %1103 = vmatprep.subr.bf16.mxu0 0
    %1104 = vmatpush1.bf16.msra.mxu0 %v1088
    %1105 = vmatprep.subr.bf16.mxu0 0
    %1106 = vmatpush1.bf16.msra.mxu0 %v1087
    %1107 = vmatprep.subr.bf16.mxu0 0
    %1108 = vmatpush2.bf16.msra.mxu0 0
    %1109 = vmatprep.subr.bf16.mxu0 0
    %1110 = vmatpush2.bf16.msra.mxu0 0
    %1111 = vmatprep.subr.bf16.mxu0 0
    %1112 = vmatpush2.bf16.msra.mxu0 0
    %1113 = vmatprep.subr.bf16.mxu0 0
    %1114 = vmatpush2.bf16.msra.mxu0 0
    %1115 = vmatprep.subr.bf16.mxu0 0
    %1116 = vmatpush2.bf16.msra.mxu0 0
    %1117 = vmatprep.subr.bf16.mxu0 0
    %1118 = vmatpush2.bf16.msra.mxu0 0
    %1119 = vmatprep.subr.bf16.mxu0 0
    %1120 = vmatpush2.bf16.msra.mxu0 0
    %1121 = vmatprep.subr.bf16.mxu0 0
    %1122 = vmatpush2.bf16.msra.mxu0 0
    %1123 = vmatprep.mubr.bf16.mxu0 0
    %1124 = vmatmul.mubr.bf16.gmra.mxu0 %v963
    %v1125 = vpop.f32.mrf.mxu0
    %v1126 = vadd.f32 %v1078, %v1125
    %v1127 = vpop.f32.mrf.mxu0
    %v1128 = vpop.f32.mrf.mxu0
    %v1129 = vadd.f32 %v1078, %v1128
    %v1130 = vpop.f32.mrf.mxu0
    %1131 = vdwg.mxu0
    %v1133 = vsel %vm113, %v1000, 0
    %v1136 = vsel %vm113, %v1063, 0
    %1138 = vmatprep.subr.mxu0 0.0
    %1139 = vmatpush1.xpose.msra.mxu0 0.0
    %1140 = vmatprep.subr.mxu0 0.0
    %1141 = vmatpush1.xpose.msra.mxu0 0.0
    %1142 = vmatprep.subr.mxu0 0.0
    %1143 = vmatpush1.xpose.msra.mxu0 0.0
    %1144 = vmatprep.subr.mxu0 0.0
    %1145 = vmatpush1.xpose.msra.mxu0 0.0
    %1146 = vmatprep.subr.mxu0 0.0
    %1147 = vmatpush1.xpose.msra.mxu0 0.0
    %1148 = vmatprep.subr.mxu0 0.0
    %1149 = vmatpush1.xpose.msra.mxu0 0.0
    %1150 = vmatprep.subr.mxu0 0.0
    %1151 = vmatpush1.xpose.msra.mxu0 0.0
    %1152 = vmatprep.subr.mxu0 0.0
    %1153 = vmatpush1.xpose.msra.mxu0 0.0
    %1154 = vmatprep.subr.mxu0 0.0
    %1155 = vmatpush1.xpose.msra.mxu0 0.0
    %1156 = vmatprep.subr.mxu0 0.0
    %1157 = vmatpush1.xpose.msra.mxu0 0.0
    %1158 = vmatprep.subr.mxu0 0.0
    %1159 = vmatpush1.xpose.msra.mxu0 0.0
    %1160 = vmatprep.subr.mxu0 0.0
    %1161 = vmatpush1.xpose.msra.mxu0 0.0
    %1162 = vmatprep.subr.mxu0 0.0
    %1163 = vmatpush1.xpose.msra.mxu0 0.0
    %1164 = vmatprep.subr.mxu0 0.0
    %1165 = vmatpush1.xpose.msra.mxu0 0.0
    %1166 = vmatprep.subr.mxu0 0.0
    %1167 = vmatpush1.xpose.msra.mxu0 0.0
    %1168 = vmatprep.subr.mxu0 0.0
    %1169 = vmatpush1.xpose.msra.mxu0 %v1136
    %1170 = vmatprep.subr.mxu0 0.0
    %1171 = vmatpush2.xpose.msra.mxu0 0.0
    %1172 = vmatprep.subr.mxu0 0.0
    %1173 = vmatpush2.xpose.msra.mxu0 0.0
    %1174 = vmatprep.subr.mxu0 0.0
    %1175 = vmatpush2.xpose.msra.mxu0 0.0
    %1176 = vmatprep.subr.mxu0 0.0
    %1177 = vmatpush2.xpose.msra.mxu0 0.0
    %1178 = vmatprep.subr.mxu0 0.0
    %1179 = vmatpush2.xpose.msra.mxu0 0.0
    %1180 = vmatprep.subr.mxu0 0.0
    %1181 = vmatpush2.xpose.msra.mxu0 0.0
    %1182 = vmatprep.subr.mxu0 0.0
    %1183 = vmatpush2.xpose.msra.mxu0 0.0
    %1184 = vmatprep.subr.mxu0 0.0
    %1185 = vmatpush2.xpose.msra.mxu0 0.0
    %1186 = vmatprep.subr.mxu0 0.0
    %1187 = vmatpush2.xpose.msra.mxu0 0.0
    %1188 = vmatprep.subr.mxu0 0.0
    %1189 = vmatpush2.xpose.msra.mxu0 0.0
    %1190 = vmatprep.subr.mxu0 0.0
    %1191 = vmatpush2.xpose.msra.mxu0 0.0
    %1192 = vmatprep.subr.mxu0 0.0
    %1193 = vmatpush2.xpose.msra.mxu0 0.0
    %1194 = vmatprep.subr.mxu0 0.0
    %1195 = vmatpush2.xpose.msra.mxu0 0.0
    %1196 = vmatprep.subr.mxu0 0.0
    %1197 = vmatpush2.xpose.msra.mxu0 0.0
    %1198 = vmatprep.subr.mxu0 0.0
    %1199 = vmatpush2.xpose.msra.mxu0 0.0
    %1200 = vmatprep.subr.mxu0 0.0
    %1201 = vmatpush2.xpose.msra.mxu0 0.0
    %1202 = vmatprep.mubr.f32.mxu0 0.0
    %1203 = vmatmul.mubr.f32.gmra.mxu0 %v1133
    %v1204 = vpop.f32.mrf.mxu0
    %v1205 = vadd.f32 0.0, %v1204
    %v1206 = vpop.f32.mrf.mxu0
    %1207 = vdwg.mxu0
    %v1209 = vsel %vm113, %v1003, 0
    %v1212 = vsel %vm113, %v1066, 0
    %1214 = vmatprep.subr.mxu0 0.0
    %1215 = vmatpush1.xpose.msra.mxu0 0.0
    %1216 = vmatprep.subr.mxu0 0.0
    %1217 = vmatpush1.xpose.msra.mxu0 0.0
    %1218 = vmatprep.subr.mxu0 0.0
    %1219 = vmatpush1.xpose.msra.mxu0 0.0
    %1220 = vmatprep.subr.mxu0 0.0
    %1221 = vmatpush1.xpose.msra.mxu0 0.0
    %1222 = vmatprep.subr.mxu0 0.0
    %1223 = vmatpush1.xpose.msra.mxu0 0.0
    %1224 = vmatprep.subr.mxu0 0.0
    %1225 = vmatpush1.xpose.msra.mxu0 0.0
    %1226 = vmatprep.subr.mxu0 0.0
    %1227 = vmatpush1.xpose.msra.mxu0 0.0
    %1228 = vmatprep.subr.mxu0 0.0
    %1229 = vmatpush1.xpose.msra.mxu0 0.0
    %1230 = vmatprep.subr.mxu0 0.0
    %1231 = vmatpush1.xpose.msra.mxu0 0.0
    %1232 = vmatprep.subr.mxu0 0.0
    %1233 = vmatpush1.xpose.msra.mxu0 0.0
    %1234 = vmatprep.subr.mxu0 0.0
    %1235 = vmatpush1.xpose.msra.mxu0 0.0
    %1236 = vmatprep.subr.mxu0 0.0
    %1237 = vmatpush1.xpose.msra.mxu0 0.0
    %1238 = vmatprep.subr.mxu0 0.0
    %1239 = vmatpush1.xpose.msra.mxu0 0.0
    %1240 = vmatprep.subr.mxu0 0.0
    %1241 = vmatpush1.xpose.msra.mxu0 0.0
    %1242 = vmatprep.subr.mxu0 0.0
    %1243 = vmatpush1.xpose.msra.mxu0 0.0
    %1244 = vmatprep.subr.mxu0 0.0
    %1245 = vmatpush1.xpose.msra.mxu0 %v1212
    %1246 = vmatprep.subr.mxu0 0.0
    %1247 = vmatpush2.xpose.msra.mxu0 0.0
    %1248 = vmatprep.subr.mxu0 0.0
    %1249 = vmatpush2.xpose.msra.mxu0 0.0
    %1250 = vmatprep.subr.mxu0 0.0
    %1251 = vmatpush2.xpose.msra.mxu0 0.0
    %1252 = vmatprep.subr.mxu0 0.0
    %1253 = vmatpush2.xpose.msra.mxu0 0.0
    %1254 = vmatprep.subr.mxu0 0.0
    %1255 = vmatpush2.xpose.msra.mxu0 0.0
    %1256 = vmatprep.subr.mxu0 0.0
    %1257 = vmatpush2.xpose.msra.mxu0 0.0
    %1258 = vmatprep.subr.mxu0 0.0
    %1259 = vmatpush2.xpose.msra.mxu0 0.0
    %1260 = vmatprep.subr.mxu0 0.0
    %1261 = vmatpush2.xpose.msra.mxu0 0.0
    %1262 = vmatprep.subr.mxu0 0.0
    %1263 = vmatpush2.xpose.msra.mxu0 0.0
    %1264 = vmatprep.subr.mxu0 0.0
    %1265 = vmatpush2.xpose.msra.mxu0 0.0
    %1266 = vmatprep.subr.mxu0 0.0
    %1267 = vmatpush2.xpose.msra.mxu0 0.0
    %1268 = vmatprep.subr.mxu0 0.0
    %1269 = vmatpush2.xpose.msra.mxu0 0.0
    %1270 = vmatprep.subr.mxu0 0.0
    %1271 = vmatpush2.xpose.msra.mxu0 0.0
    %1272 = vmatprep.subr.mxu0 0.0
    %1273 = vmatpush2.xpose.msra.mxu0 0.0
    %1274 = vmatprep.subr.mxu0 0.0
    %1275 = vmatpush2.xpose.msra.mxu0 0.0
    %1276 = vmatprep.subr.mxu0 0.0
    %1277 = vmatpush2.xpose.msra.mxu0 0.0
    %1278 = vmatprep.mubr.f32.mxu0 0.0
    %1279 = vmatmul.mubr.f32.gmra.mxu0 %v1209
    %v1280 = vpop.f32.mrf.mxu0
    %v1281 = vadd.f32 0.0, %v1280
    %v1282 = vpop.f32.mrf.mxu0
    %1283 = vdwg.mxu0
    %v1284 = vmul.f32 %v1205, 0.17677669
    %v1285 = vmul.f32 %v1281, 0.17677669
    %v1286 = vadd.f32 %v1284, %v443
    %v1287 = vadd.f32 %v1285, %v447
    %v1288 = vsel %vm452, %v1286, -inf
    %1289 = vmax.xlane.f32.xlu0 %v1288
    %v1290 = vpop.xlane.xlu0 %1289
    %v1291 = vsel %vm452, %v1287, -inf
    %1292 = vmax.xlane.f32.xlu0 %v1291
    %v1293 = vpop.xlane.xlu0 %1292
    %v1294 = vsub.f32 %v1286, %v1290
    %v1295 = vsub.f32 %v1287, %v1293
    %v1296 = vmul.f32 %v1294, 1.442695
    %v1297 = vpow.pop %v1296
    %v1298 = vmul.f32 %v1295, 1.442695
    %v1299 = vpow.pop %v1298
    %v1300 = vsel %vm452, %v1297, 0.0
    %1301 = vadd.xlane.f32.xlu0 %v1300
    %v1302 = vpop.xlane.xlu0 %1301
    %v1303 = vsel %vm452, %v1299, 0.0
    %1304 = vadd.xlane.f32.xlu0 %v1303
    %v1305 = vpop.xlane.xlu0 %1304
    %v1306 = vrcp.pop %v1302
    %v1307 = vrcp.pop %v1305
    %v1308 = vmul.f32 %v1297, %v1306
    %v1309 = vmul.f32 %v1299, %v1307
    %v1311 = vsel %vm452, %v1308, 0
    %1313 = vmatprep.subr.mxu0 0.0
    %1314 = vmatpush1.msra.mxu0 0.0
    %1315 = vmatprep.subr.mxu0 0.0
    %1316 = vmatpush1.msra.mxu0 0.0
    %1317 = vmatprep.subr.mxu0 0.0
    %1318 = vmatpush1.msra.mxu0 0.0
    %1319 = vmatprep.subr.mxu0 0.0
    %1320 = vmatpush1.msra.mxu0 0.0
    %1321 = vmatprep.subr.mxu0 0.0
    %1322 = vmatpush1.msra.mxu0 0.0
    %1323 = vmatprep.subr.mxu0 0.0
    %1324 = vmatpush1.msra.mxu0 0.0
    %1325 = vmatprep.subr.mxu0 0.0
    %1326 = vmatpush1.msra.mxu0 0.0
    %1327 = vmatprep.subr.mxu0 0.0
    %1328 = vmatpush1.msra.mxu0 0.0
    %1329 = vmatprep.subr.mxu0 0.0
    %1330 = vmatpush1.msra.mxu0 0.0
    %1331 = vmatprep.subr.mxu0 0.0
    %1332 = vmatpush1.msra.mxu0 0.0
    %1333 = vmatprep.subr.mxu0 0.0
    %1334 = vmatpush1.msra.mxu0 0.0
    %1335 = vmatprep.subr.mxu0 0.0
    %1336 = vmatpush1.msra.mxu0 0.0
    %1337 = vmatprep.subr.mxu0 0.0
    %1338 = vmatpush1.msra.mxu0 0.0
    %1339 = vmatprep.subr.mxu0 0.0
    %1340 = vmatpush1.msra.mxu0 0.0
    %1341 = vmatprep.subr.mxu0 0.0
    %1342 = vmatpush1.msra.mxu0 0.0
    %1343 = vmatprep.subr.mxu0 0.0
    %1344 = vmatpush1.msra.mxu0 %v1126
    %1345 = vmatprep.subr.mxu0 0.0
    %1346 = vmatpush2.msra.mxu0 0.0
    %1347 = vmatprep.subr.mxu0 0.0
    %1348 = vmatpush2.msra.mxu0 0.0
    %1349 = vmatprep.subr.mxu0 0.0
    %1350 = vmatpush2.msra.mxu0 0.0
    %1351 = vmatprep.subr.mxu0 0.0
    %1352 = vmatpush2.msra.mxu0 0.0
    %1353 = vmatprep.subr.mxu0 0.0
    %1354 = vmatpush2.msra.mxu0 0.0
    %1355 = vmatprep.subr.mxu0 0.0
    %1356 = vmatpush2.msra.mxu0 0.0
    %1357 = vmatprep.subr.mxu0 0.0
    %1358 = vmatpush2.msra.mxu0 0.0
    %1359 = vmatprep.subr.mxu0 0.0
    %1360 = vmatpush2.msra.mxu0 0.0
    %1361 = vmatprep.subr.mxu0 0.0
    %1362 = vmatpush2.msra.mxu0 0.0
    %1363 = vmatprep.subr.mxu0 0.0
    %1364 = vmatpush2.msra.mxu0 0.0
    %1365 = vmatprep.subr.mxu0 0.0
    %1366 = vmatpush2.msra.mxu0 0.0
    %1367 = vmatprep.subr.mxu0 0.0
    %1368 = vmatpush2.msra.mxu0 0.0
    %1369 = vmatprep.subr.mxu0 0.0
    %1370 = vmatpush2.msra.mxu0 0.0
    %1371 = vmatprep.subr.mxu0 0.0
    %1372 = vmatpush2.msra.mxu0 0.0
    %1373 = vmatprep.subr.mxu0 0.0
    %1374 = vmatpush2.msra.mxu0 0.0
    %1375 = vmatprep.subr.mxu0 0.0
    %1376 = vmatpush2.msra.mxu0 0.0
    %1377 = vmatprep.mubr.f32.mxu0 0.0
    %1378 = vmatmul.mubr.f32.gmra.mxu0 %v1311
    %v1379 = vpop.f32.mrf.mxu0
    %v1380 = vadd.f32 0.0, %v1379
    %v1381 = vpop.f32.mrf.mxu0
    %1382 = vdwg.mxu0
    %v1384 = vsel %vm452, %v1309, 0
    %1386 = vmatprep.subr.mxu0 0.0
    %1387 = vmatpush1.msra.mxu0 0.0
    %1388 = vmatprep.subr.mxu0 0.0
    %1389 = vmatpush1.msra.mxu0 0.0
    %1390 = vmatprep.subr.mxu0 0.0
    %1391 = vmatpush1.msra.mxu0 0.0
    %1392 = vmatprep.subr.mxu0 0.0
    %1393 = vmatpush1.msra.mxu0 0.0
    %1394 = vmatprep.subr.mxu0 0.0
    %1395 = vmatpush1.msra.mxu0 0.0
    %1396 = vmatprep.subr.mxu0 0.0
    %1397 = vmatpush1.msra.mxu0 0.0
    %1398 = vmatprep.subr.mxu0 0.0
    %1399 = vmatpush1.msra.mxu0 0.0
    %1400 = vmatprep.subr.mxu0 0.0
    %1401 = vmatpush1.msra.mxu0 0.0
    %1402 = vmatprep.subr.mxu0 0.0
    %1403 = vmatpush1.msra.mxu0 0.0
    %1404 = vmatprep.subr.mxu0 0.0
    %1405 = vmatpush1.msra.mxu0 0.0
    %1406 = vmatprep.subr.mxu0 0.0
    %1407 = vmatpush1.msra.mxu0 0.0
    %1408 = vmatprep.subr.mxu0 0.0
    %1409 = vmatpush1.msra.mxu0 0.0
    %1410 = vmatprep.subr.mxu0 0.0
    %1411 = vmatpush1.msra.mxu0 0.0
    %1412 = vmatprep.subr.mxu0 0.0
    %1413 = vmatpush1.msra.mxu0 0.0
    %1414 = vmatprep.subr.mxu0 0.0
    %1415 = vmatpush1.msra.mxu0 0.0
    %1416 = vmatprep.subr.mxu0 0.0
    %1417 = vmatpush1.msra.mxu0 %v1129
    %1418 = vmatprep.subr.mxu0 0.0
    %1419 = vmatpush2.msra.mxu0 0.0
    %1420 = vmatprep.subr.mxu0 0.0
    %1421 = vmatpush2.msra.mxu0 0.0
    %1422 = vmatprep.subr.mxu0 0.0
    %1423 = vmatpush2.msra.mxu0 0.0
    %1424 = vmatprep.subr.mxu0 0.0
    %1425 = vmatpush2.msra.mxu0 0.0
    %1426 = vmatprep.subr.mxu0 0.0
    %1427 = vmatpush2.msra.mxu0 0.0
    %1428 = vmatprep.subr.mxu0 0.0
    %1429 = vmatpush2.msra.mxu0 0.0
    %1430 = vmatprep.subr.mxu0 0.0
    %1431 = vmatpush2.msra.mxu0 0.0
    %1432 = vmatprep.subr.mxu0 0.0
    %1433 = vmatpush2.msra.mxu0 0.0
    %1434 = vmatprep.subr.mxu0 0.0
    %1435 = vmatpush2.msra.mxu0 0.0
    %1436 = vmatprep.subr.mxu0 0.0
    %1437 = vmatpush2.msra.mxu0 0.0
    %1438 = vmatprep.subr.mxu0 0.0
    %1439 = vmatpush2.msra.mxu0 0.0
    %1440 = vmatprep.subr.mxu0 0.0
    %1441 = vmatpush2.msra.mxu0 0.0
    %1442 = vmatprep.subr.mxu0 0.0
    %1443 = vmatpush2.msra.mxu0 0.0
    %1444 = vmatprep.subr.mxu0 0.0
    %1445 = vmatpush2.msra.mxu0 0.0
    %1446 = vmatprep.subr.mxu0 0.0
    %1447 = vmatpush2.msra.mxu0 0.0
    %1448 = vmatprep.subr.mxu0 0.0
    %1449 = vmatpush2.msra.mxu0 0.0
    %1450 = vmatprep.mubr.f32.mxu0 0.0
    %1451 = vmatmul.mubr.f32.gmra.mxu0 %v1384
    %v1452 = vpop.f32.mrf.mxu0
    %v1453 = vadd.f32 0.0, %v1452
    %v1454 = vpop.f32.mrf.mxu0
    %1455 = vdwg.mxu0
    %v1456 = vpack.c.bf16 %v1453, %v1380
    %s1457 = scalar_lea.vmem [#allocation5], 16
    %v1458 = vld [vmem:[%s1457] sm:$0xf]
    %v1459 = vld [vmem:[%s1457 + $0x4] sm:$0xf]
    %v1460 = vld [vmem:[%s1457 + $0x8] sm:$0xf]
    %v1461 = vld [vmem:[%s1457 + $0xc] sm:$0xf]
    %v1462 = vld [vmem:[#allocation8 + $0xd] sm:$0x1]
    %v1463 = vlaneseq
    %v1464 = vshrl.u32 %v1463, 7
    %v1465 = vsub.s32 0, %v1464
    %v1466 = vrot.slane %v1462, %v1465
    %v1471 = vunpack.c.l.b16 %v1458
    %v1472 = vunpack.c.l.b16 %v1459
    %v1473 = vunpack.c.l.b16 %v1460
    %v1474 = vunpack.c.l.b16 %v1461
    %v1475 = vpack.c.b16 %v1472, %v1471
    %v1476 = vpack.c.b16 %v1474, %v1473
    %v1480 = vsel %vm113, %v1456, 0
    %1482 = vmatprep.subr.bf16.mxu0 0
    %1483 = vmatpush1.bf16.msra.mxu0 0
    %1484 = vmatprep.subr.bf16.mxu0 0
    %1485 = vmatpush1.bf16.msra.mxu0 0
    %1486 = vmatprep.subr.bf16.mxu0 0
    %1487 = vmatpush1.bf16.msra.mxu0 0
    %1488 = vmatprep.subr.bf16.mxu0 0
    %1489 = vmatpush1.bf16.msra.mxu0 0
    %1490 = vmatprep.subr.bf16.mxu0 0
    %1491 = vmatpush1.bf16.msra.mxu0 0
    %1492 = vmatprep.subr.bf16.mxu0 0
    %1493 = vmatpush1.bf16.msra.mxu0 0
    %1494 = vmatprep.subr.bf16.mxu0 0
    %1495 = vmatpush1.bf16.msra.mxu0 %v1476
    %1496 = vmatprep.subr.bf16.mxu0 0
    %1497 = vmatpush1.bf16.msra.mxu0 %v1475
    %1498 = vmatprep.subr.bf16.mxu0 0
    %1499 = vmatpush2.bf16.msra.mxu0 0
    %1500 = vmatprep.subr.bf16.mxu0 0
    %1501 = vmatpush2.bf16.msra.mxu0 0
    %1502 = vmatprep.subr.bf16.mxu0 0
    %1503 = vmatpush2.bf16.msra.mxu0 0
    %1504 = vmatprep.subr.bf16.mxu0 0
    %1505 = vmatpush2.bf16.msra.mxu0 0
    %1506 = vmatprep.subr.bf16.mxu0 0
    %1507 = vmatpush2.bf16.msra.mxu0 0
    %1508 = vmatprep.subr.bf16.mxu0 0
    %1509 = vmatpush2.bf16.msra.mxu0 0
    %1510 = vmatprep.subr.bf16.mxu0 0
    %1511 = vmatpush2.bf16.msra.mxu0 0
    %1512 = vmatprep.subr.bf16.mxu0 0
    %1513 = vmatpush2.bf16.msra.mxu0 0
    %1514 = vmatprep.mubr.bf16.mxu0 0
    %1515 = vmatmul.mubr.bf16.gmra.mxu0 %v1480
    %v1516 = vpop.f32.mrf.mxu0
    %v1517 = vadd.f32 %v1466, %v1516
    %v1518 = vpop.f32.mrf.mxu0
    %v1519 = vpop.f32.mrf.mxu0
    %v1520 = vadd.f32 %v1466, %v1519
    %v1521 = vpop.f32.mrf.mxu0
    %1522 = vdwg.mxu0
    %v1523 = vadd.f32 %v937, %v1517
    %v1524 = vadd.f32 %v938, %v1520
    %v1525 = vld [vmem:[#allocation8 + $0xe] sm:$0x1]
    %v1526 = vld [vmem:[#allocation8 + $0xf] sm:$0x1]
    %v1527 = vsel %vm113, %v1523, 0.0
    %1528 = vadd.xlane.f32.xlu0 %v1527
    %v1529 = vpop.xlane.xlu0 %1528
    %v1530 = vsel %vm113, %v1524, 0.0
    %1531 = vadd.xlane.f32.xlu0 %v1530
    %v1532 = vpop.xlane.xlu0 %1531
    %v1533 = vmul.f32 %v1529, %v697
    %v1534 = vmul.f32 %v1532, %v697
    %v1535 = vsub.f32 %v1523, %v1533
    %v1536 = vsub.f32 %v1524, %v1534
    %v1537 = vmul.f32 %v1535, %v1535
    %v1538 = vmul.f32 %v1536, %v1536
    %v1539 = vsel %vm113, %v1537, 0.0
    %1540 = vadd.xlane.f32.xlu0 %v1539
    %v1541 = vpop.xlane.xlu0 %1540
    %v1542 = vsel %vm113, %v1538, 0.0
    %1543 = vadd.xlane.f32.xlu0 %v1542
    %v1544 = vpop.xlane.xlu0 %1543
    %v1545 = vmul.f32 %v1541, %v697
    %v1546 = vmul.f32 %v1544, %v697
    %v1547 = vadd.f32 %v1545, 1e-05
    %v1548 = vadd.f32 %v1546, 1e-05
    %v1549 = vrsqrt.pop %v1547
    %v1550 = vrsqrt.pop %v1548
    %v1551 = vmul.f32 %v1535, %v1549
    %v1552 = vmul.f32 %v1536, %v1550
    %v1553 = vlaneseq
    %v1554 = vshrl.u32 %v1553, 7
    %v1555 = vsub.s32 0, %v1554
    %v1556 = vrot.slane %v1525, %v1555
    %v1557 = vmul.f32 %v1551, %v1556
    %v1558 = vmul.f32 %v1552, %v1556
    %v1559 = vlaneseq
    %v1560 = vshrl.u32 %v1559, 7
    %v1561 = vsub.s32 0, %v1560
    %v1562 = vrot.slane %v1526, %v1561
    %v1563 = vadd.f32 %v1557, %v1562
    %v1564 = vadd.f32 %v1558, %v1562
    %v1565 = vpack.c.bf16 %v1564, %v1563
    %s1566 = scalar_lea.vmem [#allocation7], 16
    %v1567 = vld [vmem:[%s1566] sm:$0xf]
    %v1568 = vld [vmem:[%s1566 + $0x4] sm:$0xf]
    %v1569 = vld [vmem:[%s1566 + $0x8] sm:$0xf]
    %v1570 = vld [vmem:[%s1566 + $0xc] sm:$0xf]
    %v1571 = vld [vmem:[#allocation8 + $0x10] sm:$0x1]
    %v1572 = vlaneseq
    %v1573 = vshrl.u32 %v1572, 7
    %v1574 = vsub.s32 0, %v1573
    %v1575 = vrot.slane %v1571, %v1574
    %v1580 = vunpack.c.l.b16 %v1567
    %v1581 = vunpack.c.l.b16 %v1568
    %v1582 = vunpack.c.l.b16 %v1569
    %v1583 = vunpack.c.l.b16 %v1570
    %v1584 = vpack.c.b16 %v1581, %v1580
    %v1585 = vpack.c.b16 %v1583, %v1582
    %v1589 = vsel %vm113, %v1565, 0
    %1591 = vmatprep.subr.bf16.mxu0 0
    %1592 = vmatpush1.bf16.msra.mxu0 0
    %1593 = vmatprep.subr.bf16.mxu0 0
    %1594 = vmatpush1.bf16.msra.mxu0 0
    %1595 = vmatprep.subr.bf16.mxu0 0
    %1596 = vmatpush1.bf16.msra.mxu0 0
    %1597 = vmatprep.subr.bf16.mxu0 0
    %1598 = vmatpush1.bf16.msra.mxu0 0
    %1599 = vmatprep.subr.bf16.mxu0 0
    %1600 = vmatpush1.bf16.msra.mxu0 0
    %1601 = vmatprep.subr.bf16.mxu0 0
    %1602 = vmatpush1.bf16.msra.mxu0 0
    %1603 = vmatprep.subr.bf16.mxu0 0
    %1604 = vmatpush1.bf16.msra.mxu0 %v1585
    %1605 = vmatprep.subr.bf16.mxu0 0
    %1606 = vmatpush1.bf16.msra.mxu0 %v1584
    %1607 = vmatprep.subr.bf16.mxu0 0
    %1608 = vmatpush2.bf16.msra.mxu0 0
    %1609 = vmatprep.subr.bf16.mxu0 0
    %1610 = vmatpush2.bf16.msra.mxu0 0
    %1611 = vmatprep.subr.bf16.mxu0 0
    %1612 = vmatpush2.bf16.msra.mxu0 0
    %1613 = vmatprep.subr.bf16.mxu0 0
    %1614 = vmatpush2.bf16.msra.mxu0 0
    %1615 = vmatprep.subr.bf16.mxu0 0
    %1616 = vmatpush2.bf16.msra.mxu0 0
    %1617 = vmatprep.subr.bf16.mxu0 0
    %1618 = vmatpush2.bf16.msra.mxu0 0
    %1619 = vmatprep.subr.bf16.mxu0 0
    %1620 = vmatpush2.bf16.msra.mxu0 0
    %1621 = vmatprep.subr.bf16.mxu0 0
    %1622 = vmatpush2.bf16.msra.mxu0 0
    %1623 = vmatprep.mubr.bf16.mxu0 0
    %1624 = vmatmul.mubr.bf16.gmra.mxu0 %v1589
    %v1625 = vpop.f32.mrf.mxu0
    %v1626 = vadd.f32 %v1575, %v1625
    %v1627 = vpop.f32.mrf.mxu0
    %v1628 = vpop.f32.mrf.mxu0
    %v1629 = vadd.f32 %v1575, %v1628
    %v1630 = vpop.f32.mrf.mxu0
    %1631 = vdwg.mxu0
    %v1632 = vmul.f32 %v1626, %v1626
    %v1633 = vmul.f32 %v1629, %v1629
    %v1634 = vmul.f32 %v1626, %v1632
    %v1635 = vmul.f32 %v1629, %v1633
    %v1636 = vmul.f32 %v1634, 0.044715
    %v1637 = vmul.f32 %v1635, 0.044715
    %v1638 = vadd.f32 %v1626, %v1636
    %v1639 = vadd.f32 %v1629, %v1637
    %v1640 = vmul.f32 %v1638, 0.7978846
    %v1641 = vmul.f32 %v1639, 0.7978846
    %v1642 = vtanh.pop %v1640
    %v1643 = vtanh.pop %v1641
    %v1644 = vadd.f32 %v1642, 1.0
    %v1645 = vadd.f32 %v1643, 1.0
    %v1646 = vmul.f32 %v1644, 0.5
    %v1647 = vmul.f32 %v1645, 0.5
    %v1648 = vmul.f32 %v1626, %v1646
    %v1649 = vmul.f32 %v1629, %v1647
    %v1650 = vpack.c.bf16 %v1649, %v1648
    %s1651 = scalar_lea.vmem %s5, 32
    %v1652 = vld [vmem:[%s1651] sm:$0xf]
    %v1653 = vld [vmem:[%s1651 + $0x4] sm:$0xf]
    %v1654 = vld [vmem:[%s1651 + $0x8] sm:$0xf]
    %v1655 = vld [vmem:[%s1651 + $0xc] sm:$0xf]
    %v1656 = vld [vmem:[%s1651 + $0x10] sm:$0xf]
    %v1657 = vld [vmem:[%s1651 + $0x14] sm:$0xf]
    %v1658 = vld [vmem:[%s1651 + $0x18] sm:$0xf]
    %v1659 = vld [vmem:[%s1651 + $0x1c] sm:$0xf]
    %v1660 = vld [vmem:[#allocation8 + $0x11] sm:$0x1]
    %v1661 = vlaneseq
    %v1662 = vshrl.u32 %v1661, 7
    %v1663 = vsub.s32 0, %v1662
    %v1664 = vrot.slane %v1660, %v1663
    %v1673 = vunpack.c.l.b16 %v1652
    %v1674 = vunpack.c.l.b16 %v1653
    %v1675 = vunpack.c.l.b16 %v1654
    %v1676 = vunpack.c.l.b16 %v1655
    %v1677 = vunpack.c.l.b16 %v1656
    %v1678 = vunpack.c.l.b16 %v1657
    %v1679 = vunpack.c.l.b16 %v1658
    %v1680 = vunpack.c.l.b16 %v1659
    %v1681 = vpack.c.b16 %v1674, %v1673
    %v1682 = vpack.c.b16 %v1676, %v1675
    %v1683 = vpack.c.b16 %v1678, %v1677
    %v1684 = vpack.c.b16 %v1680, %v1679
    %v1690 = vsel %vm852, %v1650, 0
    %1692 = vmatprep.subr.bf16.mxu0 0
    %1693 = vmatpush1.bf16.msra.mxu0 0
    %1694 = vmatprep.subr.bf16.mxu0 0
    %1695 = vmatpush1.bf16.msra.mxu0 0
    %1696 = vmatprep.subr.bf16.mxu0 0
    %1697 = vmatpush1.bf16.msra.mxu0 0
    %1698 = vmatprep.subr.bf16.mxu0 0
    %1699 = vmatpush1.bf16.msra.mxu0 0
    %1700 = vmatprep.subr.bf16.mxu0 0
    %1701 = vmatpush1.bf16.msra.mxu0 %v1684
    %1702 = vmatprep.subr.bf16.mxu0 0
    %1703 = vmatpush1.bf16.msra.mxu0 %v1683
    %1704 = vmatprep.subr.bf16.mxu0 0
    %1705 = vmatpush1.bf16.msra.mxu0 %v1682
    %1706 = vmatprep.subr.bf16.mxu0 0
    %1707 = vmatpush1.bf16.msra.mxu0 %v1681
    %1708 = vmatprep.subr.bf16.mxu0 0
    %1709 = vmatpush2.bf16.msra.mxu0 0
    %1710 = vmatprep.subr.bf16.mxu0 0
    %1711 = vmatpush2.bf16.msra.mxu0 0
    %1712 = vmatprep.subr.bf16.mxu0 0
    %1713 = vmatpush2.bf16.msra.mxu0 0
    %1714 = vmatprep.subr.bf16.mxu0 0
    %1715 = vmatpush2.bf16.msra.mxu0 0
    %1716 = vmatprep.subr.bf16.mxu0 0
    %1717 = vmatpush2.bf16.msra.mxu0 0
    %1718 = vmatprep.subr.bf16.mxu0 0
    %1719 = vmatpush2.bf16.msra.mxu0 0
    %1720 = vmatprep.subr.bf16.mxu0 0
    %1721 = vmatpush2.bf16.msra.mxu0 0
    %1722 = vmatprep.subr.bf16.mxu0 0
    %1723 = vmatpush2.bf16.msra.mxu0 0
    %1724 = vmatprep.mubr.bf16.mxu0 0
    %1725 = vmatmul.mubr.bf16.gmra.mxu0 %v1690
    %v1726 = vpop.f32.mrf.mxu0
    %v1727 = vadd.f32 %v1664, %v1726
    %v1728 = vpop.f32.mrf.mxu0
    %v1729 = vpop.f32.mrf.mxu0
    %v1730 = vadd.f32 %v1664, %v1729
    %v1731 = vpop.f32.mrf.mxu0
    %1732 = vdwg.mxu0
    %v1733 = vadd.f32 %v1563, %v1727
    %v1734 = vadd.f32 %v1564, %v1730
    %v1735 = vld [vmem:[#allocation8 + $0x12] sm:$0x1]
    %v1736 = vld [vmem:[#allocation8 + $0x13] sm:$0x1]
    %v1737 = vsel %vm113, %v1733, 0.0
    %1738 = vadd.xlane.f32.xlu0 %v1737
    %v1739 = vpop.xlane.xlu0 %1738
    %v1740 = vsel %vm113, %v1734, 0.0
    %1741 = vadd.xlane.f32.xlu0 %v1740
    %v1742 = vpop.xlane.xlu0 %1741
    %v1743 = vmul.f32 %v1739, %v697
    %v1744 = vmul.f32 %v1742, %v697
    %v1745 = vsub.f32 %v1733, %v1743
    %v1746 = vsub.f32 %v1734, %v1744
    %v1747 = vmul.f32 %v1745, %v1745
    %v1748 = vmul.f32 %v1746, %v1746
    %v1749 = vsel %vm113, %v1747, 0.0
    %1750 = vadd.xlane.f32.xlu0 %v1749
    %v1751 = vpop.xlane.xlu0 %1750
    %v1752 = vsel %vm113, %v1748, 0.0
    %1753 = vadd.xlane.f32.xlu0 %v1752
    %v1754 = vpop.xlane.xlu0 %1753
    %v1755 = vmul.f32 %v1751, %v697
    %v1756 = vmul.f32 %v1754, %v697
    %v1757 = vadd.f32 %v1755, 1e-05
    %v1758 = vadd.f32 %v1756, 1e-05
    %v1759 = vrsqrt.pop %v1757
    %v1760 = vrsqrt.pop %v1758
    %v1761 = vmul.f32 %v1745, %v1759
    %v1762 = vmul.f32 %v1746, %v1760
    %v1763 = vlaneseq
    %v1764 = vshrl.u32 %v1763, 7
    %v1765 = vsub.s32 0, %v1764
    %v1766 = vrot.slane %v1735, %v1765
    %v1767 = vmul.f32 %v1761, %v1766
    %v1768 = vmul.f32 %v1762, %v1766
    %v1769 = vlaneseq
    %v1770 = vshrl.u32 %v1769, 7
    %v1771 = vsub.s32 0, %v1770
    %v1772 = vrot.slane %v1736, %v1771
    %v1773 = vadd.f32 %v1767, %v1772
    %v1774 = vadd.f32 %v1768, %v1772
    %v1775 = vld [vmem:[#allocation8 + $0x14] sm:$0x1]
    %v1776 = vld [vmem:[#allocation8 + $0x15] sm:$0x1]
    %v1777 = vlaneseq
    %v1778 = vshrl.u32 %v1777, 7
    %v1779 = vsub.s32 0, %v1778
    %v1780 = vrot.slane %v1775, %v1779
    %v1781 = vmul.f32 %v1773, %v1780
    %v1782 = vmul.f32 %v1774, %v1780
    %v1785 = vrot.slane %v1782, 7
    %vm1788 = vcmask 261127
    %v1789 = vsel %vm1788, %v1781, 0.0
    %1790 = vadd.xlane.f32.xlu0 %v1789
    %v1791 = vpop.xlane.xlu0 %1790
    %vm1792 = vcmask 253952
    %v1793 = vsel %vm1792, %v1785, 0.0
    %1794 = vadd.xlane.f32.xlu0 %v1793
    %v1795 = vpop.xlane.xlu0 %1794
    %1797 = vset.pattern.permute.xlu0 0
    %1798 = vperm.xlu0 %1797, %v1776
    %v1799 = vpop.permute.xlu0 %1798
    %v1800 = vlaneseq
    %v1801 = vshrl.u32 %v1800, 7
    %v1802 = vsub.s32 0, %v1801
    %v1803 = vrot.slane %v1799, %v1802
    %v1805 = vadd.f32 %v1791, %v1803
    %v1806 = vadd.f32 %v1795, %v1803
    %1809 = vset.pattern.permute.xlu0 0
    %1810 = vperm.xlu0 %1809, %v1805
    %v1811 = vpop.permute.xlu0 %1810
    %1812 = vset.pattern.permute.xlu0 0
    %1813 = vperm.xlu0 %1812, %v1806
    %v1814 = vpop.permute.xlu0 %1813
    %v1815 = vlaneseq
    %v1816 = vand.u32 %v1815, 127
    %v1817 = vadd.s32 %v1816, 7
    %v1818 = vlaneseq
    %v1819 = vshrl.u32 %v1818, 7
    %v1820 = vsub.s32 %v1817, %v1819
    %v1821 = vrot.slane %v1811, %v1820
    %v1822 = vadd.s32 %v1816, 4294967295
    %v1823 = vlaneseq
    %v1824 = vshrl.u32 %v1823, 7
    %v1825 = vsub.s32 %v1822, %v1824
    %v1826 = vrot.slane %v1814, %v1825
    %vm1827 = vcmask 72712
    %v1828 = vsel %vm1827, %v1826, %v1821
    %vm1830 = vcmask 15367
    %1831 = vst.msk [vmem:[#allocation10 - $0x7] sm:$0x80] %vm1830, %v1828
    // Predicated region
    $region46: #{tpu_custom_call.1} parent=1 // pred_check
      _
    $region47: #{tpu_custom_call.1} parent=1 // pred_check_branch
      %1833 = sbr.rel (0) target = $region49
    $region48: #{tpu_custom_call.1} parent=1 // pred_region
      %s1835 = ssub.s32 16, 16
      %1836 = vsyncadd [#allocation4], %s1835
      %s1838 = sshll.u32 [#allocation10], 4
      %s1839 = int_to_ptr.vmem [resolvable:$true] %s1838
      %1841 = dma.vmem_to_hbm [thread:$0]  %s1839, 16, %s7, [#allocation4]
    $region49: #{tpu_custom_call.1} parent=1 // pred_fallthru
      _
    // Predicated region
    $region50: #{tpu_custom_call.1} parent=1 // pred_check
      _
    $region51: #{tpu_custom_call.1} parent=1 // pred_check_branch
      %1843 = sbr.rel (0) target = $region53
    $region52: #{tpu_custom_call.1} parent=1 // pred_region
      %1844 = dma.done [#allocation4], 16
    $region53: #{tpu_custom_call.1} parent=1 // pred_fallthru
      _
    %1845 = vsyncpa [#allocation3], 1
    %1846 = vsyncpa [#allocation6], 1
    %1847 = vsyncpa [#allocation9], 1
    %1848 = vsyncpa [#allocation4], 1

</llo_original>
